<compile_context>
chip_gen: v5e
topology: v5e:2x2
jax: 0.10.0
libtpu: 0.0.40
codegen_flags: <defaults>
</compile_context>

<pallas_src>
import functools

import jax
import jax.numpy as jnp
from jax.experimental import pallas as pl
from jax.experimental.pallas import tpu as pltpu

# Module hyper-parameters (from nn.Conv2d(3, 6, 3, stride=1, padding=0)).
CIN = 3
COUT = 6
KH = 3
KW = 3
STRIDE = 1
PADDING = 0


def _chip_has_two_tensorcores() -> bool:
    """True only for 2-TensorCore chips (v7x); v5e/v6e are single-TC."""
    try:
        kind = jax.devices()[0].device_kind.lower()
    except Exception:
        return False
    return "v7" in kind


def _conv_kernel(x_ref, w_ref, b_ref, o_ref, *, images, ohw, row_stride):
    """Direct convolution on flat spatial planes (one grid step = `images` images).

    x_ref: (images, CIN, H*W + KW-1)   VMEM; flat planes, spatial on the lane axis
    w_ref: (CIN*KH*KW, COUT, 1)        VMEM; one (COUT,1) weight column per tap
    b_ref: (COUT, 1)                   VMEM; bias column
    o_ref: (images, COUT, OH*W)        VMEM; full-width rows (garbage cols sliced
                                       off by the wrapper)
    """
    bias_col = b_ref[...]  # (COUT, 1) f32, hoisted out of all loops

    for img in range(images):
        # f32 accumulator slab, bias-initialized (lane broadcast of the column).
        acc = jnp.zeros((COUT, ohw), jnp.float32) + bias_col

        # Fully unrolled receptive field: 27 shifted flat windows, each sliced
        # once and consumed by a single rank-1 update shared by all 6 channels.
        for ci in range(CIN):
            for kh in range(KH):
                for kw in range(KW):
                    start = kh * row_stride + kw
                    patch = x_ref[img, ci:ci + 1, start:start + ohw]   # (1, ohw)
                    w_col = w_ref[(ci * KH + kh) * KW + kw]            # (COUT, 1)
                    acc = acc + w_col * patch.astype(jnp.float32)

        # One merged, lane-dense store per image.
        o_ref[img] = acc.astype(o_ref.dtype)


def conv2d_pallas(x_nchw, weight, bias, *, num_batch_blocks=None):
    """Forward pass of Model: y = conv1(x).

    x_nchw: (N, CIN, H, W) float32 (PyTorch layout, kept throughout)
    weight: (COUT, CIN, KH, KW)
    bias:   (COUT,)
    returns (N, COUT, OH, OW) float32
    """
    n, cin, h, w = x_nchw.shape
    assert cin == CIN
    oh = (h + 2 * PADDING - KH) // STRIDE + 1
    ow = (w + 2 * PADDING - KW) // STRIDE + 1
    ohw = oh * w                    # full-width output rows; last W-OW cols are garbage
    hw_pad = h * w + (KW - 1)       # flat plane + tail pad so the last tap stays in bounds

    # Grid policy: 1 step (whole batch) on single-TC chips; 2 parallel steps on
    # v7x so each TensorCore takes half the batch.  Never more than 2 steps.
    if num_batch_blocks is None:
        num_batch_blocks = 2 if (_chip_has_two_tensorcores()
                                 and n >= 2 and n % 2 == 0) else 1
    assert n % num_batch_blocks == 0
    images_per_block = n // num_batch_blocks

    # Flat spatial planes with a (KW-1)-element zero tail (only touches the
    # garbage columns that the wrapper slices off).
    x_flat = jnp.pad(x_nchw.reshape(n, cin, h * w),
                     ((0, 0), (0, 0), (0, KW - 1)))

    # Weight columns: row (ci*KH + kh)*KW + kw holds weight[:, ci, kh, kw] as (COUT, 1).
    w_cols = jnp.transpose(weight, (1, 2, 3, 0)).reshape(CIN * KH * KW, COUT, 1)
    w_cols = w_cols.astype(jnp.float32)
    b_col = bias.reshape(COUT, 1).astype(jnp.float32)

    kernel = functools.partial(_conv_kernel, images=images_per_block,
                               ohw=ohw, row_stride=w)

    cost = pl.CostEstimate(
        flops=2 * n * COUT * oh * ow * CIN * KH * KW,
        transcendentals=0,
        bytes_accessed=4 * (x_flat.size + w_cols.size + b_col.size
                            + n * COUT * ohw),
    )

    out_flat = pl.pallas_call(
        kernel,
        out_shape=jax.ShapeDtypeStruct((n, COUT, ohw), x_nchw.dtype),
        grid_spec=pltpu.PrefetchScalarGridSpec(
            num_scalar_prefetch=0,
            grid=(num_batch_blocks,),
            in_specs=[
                # Last two block dims equal the full array dims -> (8,128) rule OK.
                pl.BlockSpec((images_per_block, cin, hw_pad), lambda b: (b, 0, 0)),
                # Tiny weight-column / bias tables: whole arrays resident in VMEM.
                pl.BlockSpec(memory_space=pltpu.MemorySpace.VMEM),
                pl.BlockSpec(memory_space=pltpu.MemorySpace.VMEM),
            ],
            out_specs=pl.BlockSpec((images_per_block, COUT, ohw),
                                   lambda b: (b, 0, 0)),
        ),
        compiler_params=pltpu.CompilerParams(
            dimension_semantics=("parallel",)),
        cost_estimate=cost,
    )(x_flat, w_cols, b_col)

    # Free contiguous reshape, then drop the W-OW wrap-around columns.
    return out_flat.reshape(n, COUT, oh, w)[:, :, :, :ow]


def _reference_conv(x_nchw, weight, bias):
    y = jax.lax.conv_general_dilated(
        x_nchw, weight,
        window_strides=(STRIDE, STRIDE),
        padding="VALID",
        dimension_numbers=("NCHW", "OIHW", "NCHW"),
    )
    return y + bias.reshape(1, COUT, 1, 1)


if __name__ == "__main__":
    key = jax.random.PRNGKey(0)
    kx, kw_, kb = jax.random.split(key, 3)

    # Small deterministic inputs consistent with Conv2d(3, 6, 3): N=2, C=3, H=W=16.
    x = jax.random.normal(kx, (2, CIN, 16, 16), dtype=jnp.float32)
    weight = jax.random.normal(kw_, (COUT, CIN, KH, KW), dtype=jnp.float32) * 0.1
    bias = jax.random.normal(kb, (COUT,), dtype=jnp.float32) * 0.1

    y_ref = _reference_conv(x, weight, bias)

    # Default grid policy (single block on v5e/v6e, 2-way parallel on v7x).
    y = conv2d_pallas(x, weight, bias)
    jax.block_until_ready(y)
    assert y.shape == (2, COUT, 14, 14), y.shape
    assert jnp.allclose(y, y_ref, atol=1e-4, rtol=1e-4), "mismatch vs reference conv"

    # Also exercise the explicit 2-block (v7x-style) grid path.
    y2 = conv2d_pallas(x, weight, bias, num_batch_blocks=2)
    jax.block_until_ready(y2)
    assert jnp.allclose(y2, y_ref, atol=1e-4, rtol=1e-4), "mismatch (2-block grid)"

    print("KERNEL_OK")
</pallas_src>

<mosaic_0001>
module attributes {stable_mosaic.version = 11 : i64} {
  func.func @_conv_kernel(%arg0: i32, %arg1: memref<2x3x258xf32, #tpu.memory_space<vmem>>, %arg2: memref<27x6x1xf32, #tpu.memory_space<vmem>>, %arg3: memref<6x1xf32, #tpu.memory_space<vmem>>, %arg4: memref<2x6x224xf32, #tpu.memory_space<vmem>>) attributes {dimension_semantics = [#tpu.dimension_semantics<parallel>], iteration_bounds = array<i64: 1>, scalar_prefetch = 0 : i64, scratch_operands = 0 : i64, tpu.core_type = #tpu.core_type<tc>, window_params = [{transform_indices = @transform_0, window_bounds = array<i64: 2, 3, 258>}, {pipeline_mode = #tpu.pipeline_mode<synchronous>, transform_indices = @transform_1, window_bounds = array<i64: 27, 6, 1>}, {pipeline_mode = #tpu.pipeline_mode<synchronous>, transform_indices = @transform_2, window_bounds = array<i64: 6, 1>}, {transform_indices = @transform_3, window_bounds = array<i64: 2, 6, 224>}]} {
    %c0 = arith.constant 0 : index
    %c0_0 = arith.constant 0 : index
    %0 = vector.load %arg3[%c0, %c0_0] : memref<6x1xf32, #tpu.memory_space<vmem>>, vector<6x1xf32>
    %cst = arith.constant 0.000000e+00 : f32
    %1 = vector.broadcast %cst : f32 to vector<6x224xf32>
    %2 = vector.broadcast %0 : vector<6x1xf32> to vector<6x224xf32>
    %3 = arith.addf %1, %2 : vector<6x224xf32>
    %c0_1 = arith.constant 0 : index
    %c0_2 = arith.constant 0 : index
    %c0_3 = arith.constant 0 : index
    %4 = vector.load %arg1[%c0_1, %c0_2, %c0_3] : memref<2x3x258xf32, #tpu.memory_space<vmem>>, vector<1x1x224xf32>
    %5 = vector.shape_cast %4 : vector<1x1x224xf32> to vector<1x224xf32>
    %c0_4 = arith.constant 0 : index
    %c0_5 = arith.constant 0 : index
    %c0_6 = arith.constant 0 : index
    %6 = vector.load %arg2[%c0_4, %c0_5, %c0_6] : memref<27x6x1xf32, #tpu.memory_space<vmem>>, vector<1x6x1xf32>
    %7 = vector.shape_cast %6 : vector<1x6x1xf32> to vector<6x1xf32>
    %8 = vector.broadcast %7 : vector<6x1xf32> to vector<6x224xf32>
    %9 = vector.broadcast %5 : vector<1x224xf32> to vector<6x224xf32>
    %10 = arith.mulf %8, %9 : vector<6x224xf32>
    %11 = arith.addf %3, %10 : vector<6x224xf32>
    %c0_7 = arith.constant 0 : index
    %c0_8 = arith.constant 0 : index
    %c1 = arith.constant 1 : index
    %12 = vector.load %arg1[%c0_7, %c0_8, %c1] : memref<2x3x258xf32, #tpu.memory_space<vmem>>, vector<1x1x224xf32>
    %13 = vector.shape_cast %12 : vector<1x1x224xf32> to vector<1x224xf32>
    %c1_9 = arith.constant 1 : index
    %c0_10 = arith.constant 0 : index
    %c0_11 = arith.constant 0 : index
    %14 = vector.load %arg2[%c1_9, %c0_10, %c0_11] : memref<27x6x1xf32, #tpu.memory_space<vmem>>, vector<1x6x1xf32>
    %15 = vector.shape_cast %14 : vector<1x6x1xf32> to vector<6x1xf32>
    %16 = vector.broadcast %15 : vector<6x1xf32> to vector<6x224xf32>
    %17 = vector.broadcast %13 : vector<1x224xf32> to vector<6x224xf32>
    %18 = arith.mulf %16, %17 : vector<6x224xf32>
    %19 = arith.addf %11, %18 : vector<6x224xf32>
    %c0_12 = arith.constant 0 : index
    %c0_13 = arith.constant 0 : index
    %c2 = arith.constant 2 : index
    %20 = vector.load %arg1[%c0_12, %c0_13, %c2] : memref<2x3x258xf32, #tpu.memory_space<vmem>>, vector<1x1x224xf32>
    %21 = vector.shape_cast %20 : vector<1x1x224xf32> to vector<1x224xf32>
    %c2_14 = arith.constant 2 : index
    %c0_15 = arith.constant 0 : index
    %c0_16 = arith.constant 0 : index
    %22 = vector.load %arg2[%c2_14, %c0_15, %c0_16] : memref<27x6x1xf32, #tpu.memory_space<vmem>>, vector<1x6x1xf32>
    %23 = vector.shape_cast %22 : vector<1x6x1xf32> to vector<6x1xf32>
    %24 = vector.broadcast %23 : vector<6x1xf32> to vector<6x224xf32>
    %25 = vector.broadcast %21 : vector<1x224xf32> to vector<6x224xf32>
    %26 = arith.mulf %24, %25 : vector<6x224xf32>
    %27 = arith.addf %19, %26 : vector<6x224xf32>
    %c0_17 = arith.constant 0 : index
    %c0_18 = arith.constant 0 : index
    %c16 = arith.constant 16 : index
    %28 = vector.load %arg1[%c0_17, %c0_18, %c16] : memref<2x3x258xf32, #tpu.memory_space<vmem>>, vector<1x1x224xf32>
    %29 = vector.shape_cast %28 : vector<1x1x224xf32> to vector<1x224xf32>
    %c3 = arith.constant 3 : index
    %c0_19 = arith.constant 0 : index
    %c0_20 = arith.constant 0 : index
    %30 = vector.load %arg2[%c3, %c0_19, %c0_20] : memref<27x6x1xf32, #tpu.memory_space<vmem>>, vector<1x6x1xf32>
    %31 = vector.shape_cast %30 : vector<1x6x1xf32> to vector<6x1xf32>
    %32 = vector.broadcast %31 : vector<6x1xf32> to vector<6x224xf32>
    %33 = vector.broadcast %29 : vector<1x224xf32> to vector<6x224xf32>
    %34 = arith.mulf %32, %33 : vector<6x224xf32>
    %35 = arith.addf %27, %34 : vector<6x224xf32>
    %c0_21 = arith.constant 0 : index
    %c0_22 = arith.constant 0 : index
    %c17 = arith.constant 17 : index
    %36 = vector.load %arg1[%c0_21, %c0_22, %c17] : memref<2x3x258xf32, #tpu.memory_space<vmem>>, vector<1x1x224xf32>
    %37 = vector.shape_cast %36 : vector<1x1x224xf32> to vector<1x224xf32>
    %c4 = arith.constant 4 : index
    %c0_23 = arith.constant 0 : index
    %c0_24 = arith.constant 0 : index
    %38 = vector.load %arg2[%c4, %c0_23, %c0_24] : memref<27x6x1xf32, #tpu.memory_space<vmem>>, vector<1x6x1xf32>
    %39 = vector.shape_cast %38 : vector<1x6x1xf32> to vector<6x1xf32>
    %40 = vector.broadcast %39 : vector<6x1xf32> to vector<6x224xf32>
    %41 = vector.broadcast %37 : vector<1x224xf32> to vector<6x224xf32>
    %42 = arith.mulf %40, %41 : vector<6x224xf32>
    %43 = arith.addf %35, %42 : vector<6x224xf32>
    %c0_25 = arith.constant 0 : index
    %c0_26 = arith.constant 0 : index
    %c18 = arith.constant 18 : index
    %44 = vector.load %arg1[%c0_25, %c0_26, %c18] : memref<2x3x258xf32, #tpu.memory_space<vmem>>, vector<1x1x224xf32>
    %45 = vector.shape_cast %44 : vector<1x1x224xf32> to vector<1x224xf32>
    %c5 = arith.constant 5 : index
    %c0_27 = arith.constant 0 : index
    %c0_28 = arith.constant 0 : index
    %46 = vector.load %arg2[%c5, %c0_27, %c0_28] : memref<27x6x1xf32, #tpu.memory_space<vmem>>, vector<1x6x1xf32>
    %47 = vector.shape_cast %46 : vector<1x6x1xf32> to vector<6x1xf32>
    %48 = vector.broadcast %47 : vector<6x1xf32> to vector<6x224xf32>
    %49 = vector.broadcast %45 : vector<1x224xf32> to vector<6x224xf32>
    %50 = arith.mulf %48, %49 : vector<6x224xf32>
    %51 = arith.addf %43, %50 : vector<6x224xf32>
    %c0_29 = arith.constant 0 : index
    %c0_30 = arith.constant 0 : index
    %c32 = arith.constant 32 : index
    %52 = vector.load %arg1[%c0_29, %c0_30, %c32] : memref<2x3x258xf32, #tpu.memory_space<vmem>>, vector<1x1x224xf32>
    %53 = vector.shape_cast %52 : vector<1x1x224xf32> to vector<1x224xf32>
    %c6 = arith.constant 6 : index
    %c0_31 = arith.constant 0 : index
    %c0_32 = arith.constant 0 : index
    %54 = vector.load %arg2[%c6, %c0_31, %c0_32] : memref<27x6x1xf32, #tpu.memory_space<vmem>>, vector<1x6x1xf32>
    %55 = vector.shape_cast %54 : vector<1x6x1xf32> to vector<6x1xf32>
    %56 = vector.broadcast %55 : vector<6x1xf32> to vector<6x224xf32>
    %57 = vector.broadcast %53 : vector<1x224xf32> to vector<6x224xf32>
    %58 = arith.mulf %56, %57 : vector<6x224xf32>
    %59 = arith.addf %51, %58 : vector<6x224xf32>
    %c0_33 = arith.constant 0 : index
    %c0_34 = arith.constant 0 : index
    %c33 = arith.constant 33 : index
    %60 = vector.load %arg1[%c0_33, %c0_34, %c33] : memref<2x3x258xf32, #tpu.memory_space<vmem>>, vector<1x1x224xf32>
    %61 = vector.shape_cast %60 : vector<1x1x224xf32> to vector<1x224xf32>
    %c7 = arith.constant 7 : index
    %c0_35 = arith.constant 0 : index
    %c0_36 = arith.constant 0 : index
    %62 = vector.load %arg2[%c7, %c0_35, %c0_36] : memref<27x6x1xf32, #tpu.memory_space<vmem>>, vector<1x6x1xf32>
    %63 = vector.shape_cast %62 : vector<1x6x1xf32> to vector<6x1xf32>
    %64 = vector.broadcast %63 : vector<6x1xf32> to vector<6x224xf32>
    %65 = vector.broadcast %61 : vector<1x224xf32> to vector<6x224xf32>
    %66 = arith.mulf %64, %65 : vector<6x224xf32>
    %67 = arith.addf %59, %66 : vector<6x224xf32>
    %c0_37 = arith.constant 0 : index
    %c0_38 = arith.constant 0 : index
    %c34 = arith.constant 34 : index
    %68 = vector.load %arg1[%c0_37, %c0_38, %c34] : memref<2x3x258xf32, #tpu.memory_space<vmem>>, vector<1x1x224xf32>
    %69 = vector.shape_cast %68 : vector<1x1x224xf32> to vector<1x224xf32>
    %c8 = arith.constant 8 : index
    %c0_39 = arith.constant 0 : index
    %c0_40 = arith.constant 0 : index
    %70 = vector.load %arg2[%c8, %c0_39, %c0_40] : memref<27x6x1xf32, #tpu.memory_space<vmem>>, vector<1x6x1xf32>
    %71 = vector.shape_cast %70 : vector<1x6x1xf32> to vector<6x1xf32>
    %72 = vector.broadcast %71 : vector<6x1xf32> to vector<6x224xf32>
    %73 = vector.broadcast %69 : vector<1x224xf32> to vector<6x224xf32>
    %74 = arith.mulf %72, %73 : vector<6x224xf32>
    %75 = arith.addf %67, %74 : vector<6x224xf32>
    %c0_41 = arith.constant 0 : index
    %c1_42 = arith.constant 1 : index
    %c0_43 = arith.constant 0 : index
    %76 = vector.load %arg1[%c0_41, %c1_42, %c0_43] : memref<2x3x258xf32, #tpu.memory_space<vmem>>, vector<1x1x224xf32>
    %77 = vector.shape_cast %76 : vector<1x1x224xf32> to vector<1x224xf32>
    %c9 = arith.constant 9 : index
    %c0_44 = arith.constant 0 : index
    %c0_45 = arith.constant 0 : index
    %78 = vector.load %arg2[%c9, %c0_44, %c0_45] : memref<27x6x1xf32, #tpu.memory_space<vmem>>, vector<1x6x1xf32>
    %79 = vector.shape_cast %78 : vector<1x6x1xf32> to vector<6x1xf32>
    %80 = vector.broadcast %79 : vector<6x1xf32> to vector<6x224xf32>
    %81 = vector.broadcast %77 : vector<1x224xf32> to vector<6x224xf32>
    %82 = arith.mulf %80, %81 : vector<6x224xf32>
    %83 = arith.addf %75, %82 : vector<6x224xf32>
    %c0_46 = arith.constant 0 : index
    %c1_47 = arith.constant 1 : index
    %c1_48 = arith.constant 1 : index
    %84 = vector.load %arg1[%c0_46, %c1_47, %c1_48] : memref<2x3x258xf32, #tpu.memory_space<vmem>>, vector<1x1x224xf32>
    %85 = vector.shape_cast %84 : vector<1x1x224xf32> to vector<1x224xf32>
    %c10 = arith.constant 10 : index
    %c0_49 = arith.constant 0 : index
    %c0_50 = arith.constant 0 : index
    %86 = vector.load %arg2[%c10, %c0_49, %c0_50] : memref<27x6x1xf32, #tpu.memory_space<vmem>>, vector<1x6x1xf32>
    %87 = vector.shape_cast %86 : vector<1x6x1xf32> to vector<6x1xf32>
    %88 = vector.broadcast %87 : vector<6x1xf32> to vector<6x224xf32>
    %89 = vector.broadcast %85 : vector<1x224xf32> to vector<6x224xf32>
    %90 = arith.mulf %88, %89 : vector<6x224xf32>
    %91 = arith.addf %83, %90 : vector<6x224xf32>
    %c0_51 = arith.constant 0 : index
    %c1_52 = arith.constant 1 : index
    %c2_53 = arith.constant 2 : index
    %92 = vector.load %arg1[%c0_51, %c1_52, %c2_53] : memref<2x3x258xf32, #tpu.memory_space<vmem>>, vector<1x1x224xf32>
    %93 = vector.shape_cast %92 : vector<1x1x224xf32> to vector<1x224xf32>
    %c11 = arith.constant 11 : index
    %c0_54 = arith.constant 0 : index
    %c0_55 = arith.constant 0 : index
    %94 = vector.load %arg2[%c11, %c0_54, %c0_55] : memref<27x6x1xf32, #tpu.memory_space<vmem>>, vector<1x6x1xf32>
    %95 = vector.shape_cast %94 : vector<1x6x1xf32> to vector<6x1xf32>
    %96 = vector.broadcast %95 : vector<6x1xf32> to vector<6x224xf32>
    %97 = vector.broadcast %93 : vector<1x224xf32> to vector<6x224xf32>
    %98 = arith.mulf %96, %97 : vector<6x224xf32>
    %99 = arith.addf %91, %98 : vector<6x224xf32>
    %c0_56 = arith.constant 0 : index
    %c1_57 = arith.constant 1 : index
    %c16_58 = arith.constant 16 : index
    %100 = vector.load %arg1[%c0_56, %c1_57, %c16_58] : memref<2x3x258xf32, #tpu.memory_space<vmem>>, vector<1x1x224xf32>
    %101 = vector.shape_cast %100 : vector<1x1x224xf32> to vector<1x224xf32>
    %c12 = arith.constant 12 : index
    %c0_59 = arith.constant 0 : index
    %c0_60 = arith.constant 0 : index
    %102 = vector.load %arg2[%c12, %c0_59, %c0_60] : memref<27x6x1xf32, #tpu.memory_space<vmem>>, vector<1x6x1xf32>
    %103 = vector.shape_cast %102 : vector<1x6x1xf32> to vector<6x1xf32>
    %104 = vector.broadcast %103 : vector<6x1xf32> to vector<6x224xf32>
    %105 = vector.broadcast %101 : vector<1x224xf32> to vector<6x224xf32>
    %106 = arith.mulf %104, %105 : vector<6x224xf32>
    %107 = arith.addf %99, %106 : vector<6x224xf32>
    %c0_61 = arith.constant 0 : index
    %c1_62 = arith.constant 1 : index
    %c17_63 = arith.constant 17 : index
    %108 = vector.load %arg1[%c0_61, %c1_62, %c17_63] : memref<2x3x258xf32, #tpu.memory_space<vmem>>, vector<1x1x224xf32>
    %109 = vector.shape_cast %108 : vector<1x1x224xf32> to vector<1x224xf32>
    %c13 = arith.constant 13 : index
    %c0_64 = arith.constant 0 : index
    %c0_65 = arith.constant 0 : index
    %110 = vector.load %arg2[%c13, %c0_64, %c0_65] : memref<27x6x1xf32, #tpu.memory_space<vmem>>, vector<1x6x1xf32>
    %111 = vector.shape_cast %110 : vector<1x6x1xf32> to vector<6x1xf32>
    %112 = vector.broadcast %111 : vector<6x1xf32> to vector<6x224xf32>
    %113 = vector.broadcast %109 : vector<1x224xf32> to vector<6x224xf32>
    %114 = arith.mulf %112, %113 : vector<6x224xf32>
    %115 = arith.addf %107, %114 : vector<6x224xf32>
    %c0_66 = arith.constant 0 : index
    %c1_67 = arith.constant 1 : index
    %c18_68 = arith.constant 18 : index
    %116 = vector.load %arg1[%c0_66, %c1_67, %c18_68] : memref<2x3x258xf32, #tpu.memory_space<vmem>>, vector<1x1x224xf32>
    %117 = vector.shape_cast %116 : vector<1x1x224xf32> to vector<1x224xf32>
    %c14 = arith.constant 14 : index
    %c0_69 = arith.constant 0 : index
    %c0_70 = arith.constant 0 : index
    %118 = vector.load %arg2[%c14, %c0_69, %c0_70] : memref<27x6x1xf32, #tpu.memory_space<vmem>>, vector<1x6x1xf32>
    %119 = vector.shape_cast %118 : vector<1x6x1xf32> to vector<6x1xf32>
    %120 = vector.broadcast %119 : vector<6x1xf32> to vector<6x224xf32>
    %121 = vector.broadcast %117 : vector<1x224xf32> to vector<6x224xf32>
    %122 = arith.mulf %120, %121 : vector<6x224xf32>
    %123 = arith.addf %115, %122 : vector<6x224xf32>
    %c0_71 = arith.constant 0 : index
    %c1_72 = arith.constant 1 : index
    %c32_73 = arith.constant 32 : index
    %124 = vector.load %arg1[%c0_71, %c1_72, %c32_73] : memref<2x3x258xf32, #tpu.memory_space<vmem>>, vector<1x1x224xf32>
    %125 = vector.shape_cast %124 : vector<1x1x224xf32> to vector<1x224xf32>
    %c15 = arith.constant 15 : index
    %c0_74 = arith.constant 0 : index
    %c0_75 = arith.constant 0 : index
    %126 = vector.load %arg2[%c15, %c0_74, %c0_75] : memref<27x6x1xf32, #tpu.memory_space<vmem>>, vector<1x6x1xf32>
    %127 = vector.shape_cast %126 : vector<1x6x1xf32> to vector<6x1xf32>
    %128 = vector.broadcast %127 : vector<6x1xf32> to vector<6x224xf32>
    %129 = vector.broadcast %125 : vector<1x224xf32> to vector<6x224xf32>
    %130 = arith.mulf %128, %129 : vector<6x224xf32>
    %131 = arith.addf %123, %130 : vector<6x224xf32>
    %c0_76 = arith.constant 0 : index
    %c1_77 = arith.constant 1 : index
    %c33_78 = arith.constant 33 : index
    %132 = vector.load %arg1[%c0_76, %c1_77, %c33_78] : memref<2x3x258xf32, #tpu.memory_space<vmem>>, vector<1x1x224xf32>
    %133 = vector.shape_cast %132 : vector<1x1x224xf32> to vector<1x224xf32>
    %c16_79 = arith.constant 16 : index
    %c0_80 = arith.constant 0 : index
    %c0_81 = arith.constant 0 : index
    %134 = vector.load %arg2[%c16_79, %c0_80, %c0_81] : memref<27x6x1xf32, #tpu.memory_space<vmem>>, vector<1x6x1xf32>
    %135 = vector.shape_cast %134 : vector<1x6x1xf32> to vector<6x1xf32>
    %136 = vector.broadcast %135 : vector<6x1xf32> to vector<6x224xf32>
    %137 = vector.broadcast %133 : vector<1x224xf32> to vector<6x224xf32>
    %138 = arith.mulf %136, %137 : vector<6x224xf32>
    %139 = arith.addf %131, %138 : vector<6x224xf32>
    %c0_82 = arith.constant 0 : index
    %c1_83 = arith.constant 1 : index
    %c34_84 = arith.constant 34 : index
    %140 = vector.load %arg1[%c0_82, %c1_83, %c34_84] : memref<2x3x258xf32, #tpu.memory_space<vmem>>, vector<1x1x224xf32>
    %141 = vector.shape_cast %140 : vector<1x1x224xf32> to vector<1x224xf32>
    %c17_85 = arith.constant 17 : index
    %c0_86 = arith.constant 0 : index
    %c0_87 = arith.constant 0 : index
    %142 = vector.load %arg2[%c17_85, %c0_86, %c0_87] : memref<27x6x1xf32, #tpu.memory_space<vmem>>, vector<1x6x1xf32>
    %143 = vector.shape_cast %142 : vector<1x6x1xf32> to vector<6x1xf32>
    %144 = vector.broadcast %143 : vector<6x1xf32> to vector<6x224xf32>
    %145 = vector.broadcast %141 : vector<1x224xf32> to vector<6x224xf32>
    %146 = arith.mulf %144, %145 : vector<6x224xf32>
    %147 = arith.addf %139, %146 : vector<6x224xf32>
    %c0_88 = arith.constant 0 : index
    %c2_89 = arith.constant 2 : index
    %c0_90 = arith.constant 0 : index
    %148 = vector.load %arg1[%c0_88, %c2_89, %c0_90] : memref<2x3x258xf32, #tpu.memory_space<vmem>>, vector<1x1x224xf32>
    %149 = vector.shape_cast %148 : vector<1x1x224xf32> to vector<1x224xf32>
    %c18_91 = arith.constant 18 : index
    %c0_92 = arith.constant 0 : index
    %c0_93 = arith.constant 0 : index
    %150 = vector.load %arg2[%c18_91, %c0_92, %c0_93] : memref<27x6x1xf32, #tpu.memory_space<vmem>>, vector<1x6x1xf32>
    %151 = vector.shape_cast %150 : vector<1x6x1xf32> to vector<6x1xf32>
    %152 = vector.broadcast %151 : vector<6x1xf32> to vector<6x224xf32>
    %153 = vector.broadcast %149 : vector<1x224xf32> to vector<6x224xf32>
    %154 = arith.mulf %152, %153 : vector<6x224xf32>
    %155 = arith.addf %147, %154 : vector<6x224xf32>
    %c0_94 = arith.constant 0 : index
    %c2_95 = arith.constant 2 : index
    %c1_96 = arith.constant 1 : index
    %156 = vector.load %arg1[%c0_94, %c2_95, %c1_96] : memref<2x3x258xf32, #tpu.memory_space<vmem>>, vector<1x1x224xf32>
    %157 = vector.shape_cast %156 : vector<1x1x224xf32> to vector<1x224xf32>
    %c19 = arith.constant 19 : index
    %c0_97 = arith.constant 0 : index
    %c0_98 = arith.constant 0 : index
    %158 = vector.load %arg2[%c19, %c0_97, %c0_98] : memref<27x6x1xf32, #tpu.memory_space<vmem>>, vector<1x6x1xf32>
    %159 = vector.shape_cast %158 : vector<1x6x1xf32> to vector<6x1xf32>
    %160 = vector.broadcast %159 : vector<6x1xf32> to vector<6x224xf32>
    %161 = vector.broadcast %157 : vector<1x224xf32> to vector<6x224xf32>
    %162 = arith.mulf %160, %161 : vector<6x224xf32>
    %163 = arith.addf %155, %162 : vector<6x224xf32>
    %c0_99 = arith.constant 0 : index
    %c2_100 = arith.constant 2 : index
    %c2_101 = arith.constant 2 : index
    %164 = vector.load %arg1[%c0_99, %c2_100, %c2_101] : memref<2x3x258xf32, #tpu.memory_space<vmem>>, vector<1x1x224xf32>
    %165 = vector.shape_cast %164 : vector<1x1x224xf32> to vector<1x224xf32>
    %c20 = arith.constant 20 : index
    %c0_102 = arith.constant 0 : index
    %c0_103 = arith.constant 0 : index
    %166 = vector.load %arg2[%c20, %c0_102, %c0_103] : memref<27x6x1xf32, #tpu.memory_space<vmem>>, vector<1x6x1xf32>
    %167 = vector.shape_cast %166 : vector<1x6x1xf32> to vector<6x1xf32>
    %168 = vector.broadcast %167 : vector<6x1xf32> to vector<6x224xf32>
    %169 = vector.broadcast %165 : vector<1x224xf32> to vector<6x224xf32>
    %170 = arith.mulf %168, %169 : vector<6x224xf32>
    %171 = arith.addf %163, %170 : vector<6x224xf32>
    %c0_104 = arith.constant 0 : index
    %c2_105 = arith.constant 2 : index
    %c16_106 = arith.constant 16 : index
    %172 = vector.load %arg1[%c0_104, %c2_105, %c16_106] : memref<2x3x258xf32, #tpu.memory_space<vmem>>, vector<1x1x224xf32>
    %173 = vector.shape_cast %172 : vector<1x1x224xf32> to vector<1x224xf32>
    %c21 = arith.constant 21 : index
    %c0_107 = arith.constant 0 : index
    %c0_108 = arith.constant 0 : index
    %174 = vector.load %arg2[%c21, %c0_107, %c0_108] : memref<27x6x1xf32, #tpu.memory_space<vmem>>, vector<1x6x1xf32>
    %175 = vector.shape_cast %174 : vector<1x6x1xf32> to vector<6x1xf32>
    %176 = vector.broadcast %175 : vector<6x1xf32> to vector<6x224xf32>
    %177 = vector.broadcast %173 : vector<1x224xf32> to vector<6x224xf32>
    %178 = arith.mulf %176, %177 : vector<6x224xf32>
    %179 = arith.addf %171, %178 : vector<6x224xf32>
    %c0_109 = arith.constant 0 : index
    %c2_110 = arith.constant 2 : index
    %c17_111 = arith.constant 17 : index
    %180 = vector.load %arg1[%c0_109, %c2_110, %c17_111] : memref<2x3x258xf32, #tpu.memory_space<vmem>>, vector<1x1x224xf32>
    %181 = vector.shape_cast %180 : vector<1x1x224xf32> to vector<1x224xf32>
    %c22 = arith.constant 22 : index
    %c0_112 = arith.constant 0 : index
    %c0_113 = arith.constant 0 : index
    %182 = vector.load %arg2[%c22, %c0_112, %c0_113] : memref<27x6x1xf32, #tpu.memory_space<vmem>>, vector<1x6x1xf32>
    %183 = vector.shape_cast %182 : vector<1x6x1xf32> to vector<6x1xf32>
    %184 = vector.broadcast %183 : vector<6x1xf32> to vector<6x224xf32>
    %185 = vector.broadcast %181 : vector<1x224xf32> to vector<6x224xf32>
    %186 = arith.mulf %184, %185 : vector<6x224xf32>
    %187 = arith.addf %179, %186 : vector<6x224xf32>
    %c0_114 = arith.constant 0 : index
    %c2_115 = arith.constant 2 : index
    %c18_116 = arith.constant 18 : index
    %188 = vector.load %arg1[%c0_114, %c2_115, %c18_116] : memref<2x3x258xf32, #tpu.memory_space<vmem>>, vector<1x1x224xf32>
    %189 = vector.shape_cast %188 : vector<1x1x224xf32> to vector<1x224xf32>
    %c23 = arith.constant 23 : index
    %c0_117 = arith.constant 0 : index
    %c0_118 = arith.constant 0 : index
    %190 = vector.load %arg2[%c23, %c0_117, %c0_118] : memref<27x6x1xf32, #tpu.memory_space<vmem>>, vector<1x6x1xf32>
    %191 = vector.shape_cast %190 : vector<1x6x1xf32> to vector<6x1xf32>
    %192 = vector.broadcast %191 : vector<6x1xf32> to vector<6x224xf32>
    %193 = vector.broadcast %189 : vector<1x224xf32> to vector<6x224xf32>
    %194 = arith.mulf %192, %193 : vector<6x224xf32>
    %195 = arith.addf %187, %194 : vector<6x224xf32>
    %c0_119 = arith.constant 0 : index
    %c2_120 = arith.constant 2 : index
    %c32_121 = arith.constant 32 : index
    %196 = vector.load %arg1[%c0_119, %c2_120, %c32_121] : memref<2x3x258xf32, #tpu.memory_space<vmem>>, vector<1x1x224xf32>
    %197 = vector.shape_cast %196 : vector<1x1x224xf32> to vector<1x224xf32>
    %c24 = arith.constant 24 : index
    %c0_122 = arith.constant 0 : index
    %c0_123 = arith.constant 0 : index
    %198 = vector.load %arg2[%c24, %c0_122, %c0_123] : memref<27x6x1xf32, #tpu.memory_space<vmem>>, vector<1x6x1xf32>
    %199 = vector.shape_cast %198 : vector<1x6x1xf32> to vector<6x1xf32>
    %200 = vector.broadcast %199 : vector<6x1xf32> to vector<6x224xf32>
    %201 = vector.broadcast %197 : vector<1x224xf32> to vector<6x224xf32>
    %202 = arith.mulf %200, %201 : vector<6x224xf32>
    %203 = arith.addf %195, %202 : vector<6x224xf32>
    %c0_124 = arith.constant 0 : index
    %c2_125 = arith.constant 2 : index
    %c33_126 = arith.constant 33 : index
    %204 = vector.load %arg1[%c0_124, %c2_125, %c33_126] : memref<2x3x258xf32, #tpu.memory_space<vmem>>, vector<1x1x224xf32>
    %205 = vector.shape_cast %204 : vector<1x1x224xf32> to vector<1x224xf32>
    %c25 = arith.constant 25 : index
    %c0_127 = arith.constant 0 : index
    %c0_128 = arith.constant 0 : index
    %206 = vector.load %arg2[%c25, %c0_127, %c0_128] : memref<27x6x1xf32, #tpu.memory_space<vmem>>, vector<1x6x1xf32>
    %207 = vector.shape_cast %206 : vector<1x6x1xf32> to vector<6x1xf32>
    %208 = vector.broadcast %207 : vector<6x1xf32> to vector<6x224xf32>
    %209 = vector.broadcast %205 : vector<1x224xf32> to vector<6x224xf32>
    %210 = arith.mulf %208, %209 : vector<6x224xf32>
    %211 = arith.addf %203, %210 : vector<6x224xf32>
    %c0_129 = arith.constant 0 : index
    %c2_130 = arith.constant 2 : index
    %c34_131 = arith.constant 34 : index
    %212 = vector.load %arg1[%c0_129, %c2_130, %c34_131] : memref<2x3x258xf32, #tpu.memory_space<vmem>>, vector<1x1x224xf32>
    %213 = vector.shape_cast %212 : vector<1x1x224xf32> to vector<1x224xf32>
    %c26 = arith.constant 26 : index
    %c0_132 = arith.constant 0 : index
    %c0_133 = arith.constant 0 : index
    %214 = vector.load %arg2[%c26, %c0_132, %c0_133] : memref<27x6x1xf32, #tpu.memory_space<vmem>>, vector<1x6x1xf32>
    %215 = vector.shape_cast %214 : vector<1x6x1xf32> to vector<6x1xf32>
    %216 = vector.broadcast %215 : vector<6x1xf32> to vector<6x224xf32>
    %217 = vector.broadcast %213 : vector<1x224xf32> to vector<6x224xf32>
    %218 = arith.mulf %216, %217 : vector<6x224xf32>
    %219 = arith.addf %211, %218 : vector<6x224xf32>
    %c0_134 = arith.constant 0 : index
    %c0_135 = arith.constant 0 : index
    %c0_136 = arith.constant 0 : index
    %220 = vector.load %arg4[%c0_134, %c0_135, %c0_136] : memref<2x6x224xf32, #tpu.memory_space<vmem>>, vector<1x6x224xf32>
    %221 = vector.shape_cast %220 : vector<1x6x224xf32> to vector<6x224xf32>
    %222 = vector.shape_cast %219 : vector<6x224xf32> to vector<1x6x224xf32>
    tpu.vector_store %arg4[%c0_134, %c0_135, %c0_136], %222 {strides = array<i32>} : memref<2x6x224xf32, #tpu.memory_space<vmem>>, vector<1x6x224xf32>,
    %cst_137 = arith.constant 0.000000e+00 : f32
    %223 = vector.broadcast %cst_137 : f32 to vector<6x224xf32>
    %224 = vector.broadcast %0 : vector<6x1xf32> to vector<6x224xf32>
    %225 = arith.addf %223, %224 : vector<6x224xf32>
    %c1_138 = arith.constant 1 : index
    %c0_139 = arith.constant 0 : index
    %c0_140 = arith.constant 0 : index
    %226 = vector.load %arg1[%c1_138, %c0_139, %c0_140] : memref<2x3x258xf32, #tpu.memory_space<vmem>>, vector<1x1x224xf32>
    %227 = vector.shape_cast %226 : vector<1x1x224xf32> to vector<1x224xf32>
    %c0_141 = arith.constant 0 : index
    %c0_142 = arith.constant 0 : index
    %c0_143 = arith.constant 0 : index
    %228 = vector.load %arg2[%c0_141, %c0_142, %c0_143] : memref<27x6x1xf32, #tpu.memory_space<vmem>>, vector<1x6x1xf32>
    %229 = vector.shape_cast %228 : vector<1x6x1xf32> to vector<6x1xf32>
    %230 = vector.broadcast %229 : vector<6x1xf32> to vector<6x224xf32>
    %231 = vector.broadcast %227 : vector<1x224xf32> to vector<6x224xf32>
    %232 = arith.mulf %230, %231 : vector<6x224xf32>
    %233 = arith.addf %225, %232 : vector<6x224xf32>
    %c1_144 = arith.constant 1 : index
    %c0_145 = arith.constant 0 : index
    %c1_146 = arith.constant 1 : index
    %234 = vector.load %arg1[%c1_144, %c0_145, %c1_146] : memref<2x3x258xf32, #tpu.memory_space<vmem>>, vector<1x1x224xf32>
    %235 = vector.shape_cast %234 : vector<1x1x224xf32> to vector<1x224xf32>
    %c1_147 = arith.constant 1 : index
    %c0_148 = arith.constant 0 : index
    %c0_149 = arith.constant 0 : index
    %236 = vector.load %arg2[%c1_147, %c0_148, %c0_149] : memref<27x6x1xf32, #tpu.memory_space<vmem>>, vector<1x6x1xf32>
    %237 = vector.shape_cast %236 : vector<1x6x1xf32> to vector<6x1xf32>
    %238 = vector.broadcast %237 : vector<6x1xf32> to vector<6x224xf32>
    %239 = vector.broadcast %235 : vector<1x224xf32> to vector<6x224xf32>
    %240 = arith.mulf %238, %239 : vector<6x224xf32>
    %241 = arith.addf %233, %240 : vector<6x224xf32>
    %c1_150 = arith.constant 1 : index
    %c0_151 = arith.constant 0 : index
    %c2_152 = arith.constant 2 : index
    %242 = vector.load %arg1[%c1_150, %c0_151, %c2_152] : memref<2x3x258xf32, #tpu.memory_space<vmem>>, vector<1x1x224xf32>
    %243 = vector.shape_cast %242 : vector<1x1x224xf32> to vector<1x224xf32>
    %c2_153 = arith.constant 2 : index
    %c0_154 = arith.constant 0 : index
    %c0_155 = arith.constant 0 : index
    %244 = vector.load %arg2[%c2_153, %c0_154, %c0_155] : memref<27x6x1xf32, #tpu.memory_space<vmem>>, vector<1x6x1xf32>
    %245 = vector.shape_cast %244 : vector<1x6x1xf32> to vector<6x1xf32>
    %246 = vector.broadcast %245 : vector<6x1xf32> to vector<6x224xf32>
    %247 = vector.broadcast %243 : vector<1x224xf32> to vector<6x224xf32>
    %248 = arith.mulf %246, %247 : vector<6x224xf32>
    %249 = arith.addf %241, %248 : vector<6x224xf32>
    %c1_156 = arith.constant 1 : index
    %c0_157 = arith.constant 0 : index
    %c16_158 = arith.constant 16 : index
    %250 = vector.load %arg1[%c1_156, %c0_157, %c16_158] : memref<2x3x258xf32, #tpu.memory_space<vmem>>, vector<1x1x224xf32>
    %251 = vector.shape_cast %250 : vector<1x1x224xf32> to vector<1x224xf32>
    %c3_159 = arith.constant 3 : index
    %c0_160 = arith.constant 0 : index
    %c0_161 = arith.constant 0 : index
    %252 = vector.load %arg2[%c3_159, %c0_160, %c0_161] : memref<27x6x1xf32, #tpu.memory_space<vmem>>, vector<1x6x1xf32>
    %253 = vector.shape_cast %252 : vector<1x6x1xf32> to vector<6x1xf32>
    %254 = vector.broadcast %253 : vector<6x1xf32> to vector<6x224xf32>
    %255 = vector.broadcast %251 : vector<1x224xf32> to vector<6x224xf32>
    %256 = arith.mulf %254, %255 : vector<6x224xf32>
    %257 = arith.addf %249, %256 : vector<6x224xf32>
    %c1_162 = arith.constant 1 : index
    %c0_163 = arith.constant 0 : index
    %c17_164 = arith.constant 17 : index
    %258 = vector.load %arg1[%c1_162, %c0_163, %c17_164] : memref<2x3x258xf32, #tpu.memory_space<vmem>>, vector<1x1x224xf32>
    %259 = vector.shape_cast %258 : vector<1x1x224xf32> to vector<1x224xf32>
    %c4_165 = arith.constant 4 : index
    %c0_166 = arith.constant 0 : index
    %c0_167 = arith.constant 0 : index
    %260 = vector.load %arg2[%c4_165, %c0_166, %c0_167] : memref<27x6x1xf32, #tpu.memory_space<vmem>>, vector<1x6x1xf32>
    %261 = vector.shape_cast %260 : vector<1x6x1xf32> to vector<6x1xf32>
    %262 = vector.broadcast %261 : vector<6x1xf32> to vector<6x224xf32>
    %263 = vector.broadcast %259 : vector<1x224xf32> to vector<6x224xf32>
    %264 = arith.mulf %262, %263 : vector<6x224xf32>
    %265 = arith.addf %257, %264 : vector<6x224xf32>
    %c1_168 = arith.constant 1 : index
    %c0_169 = arith.constant 0 : index
    %c18_170 = arith.constant 18 : index
    %266 = vector.load %arg1[%c1_168, %c0_169, %c18_170] : memref<2x3x258xf32, #tpu.memory_space<vmem>>, vector<1x1x224xf32>
    %267 = vector.shape_cast %266 : vector<1x1x224xf32> to vector<1x224xf32>
    %c5_171 = arith.constant 5 : index
    %c0_172 = arith.constant 0 : index
    %c0_173 = arith.constant 0 : index
    %268 = vector.load %arg2[%c5_171, %c0_172, %c0_173] : memref<27x6x1xf32, #tpu.memory_space<vmem>>, vector<1x6x1xf32>
    %269 = vector.shape_cast %268 : vector<1x6x1xf32> to vector<6x1xf32>
    %270 = vector.broadcast %269 : vector<6x1xf32> to vector<6x224xf32>
    %271 = vector.broadcast %267 : vector<1x224xf32> to vector<6x224xf32>
    %272 = arith.mulf %270, %271 : vector<6x224xf32>
    %273 = arith.addf %265, %272 : vector<6x224xf32>
    %c1_174 = arith.constant 1 : index
    %c0_175 = arith.constant 0 : index
    %c32_176 = arith.constant 32 : index
    %274 = vector.load %arg1[%c1_174, %c0_175, %c32_176] : memref<2x3x258xf32, #tpu.memory_space<vmem>>, vector<1x1x224xf32>
    %275 = vector.shape_cast %274 : vector<1x1x224xf32> to vector<1x224xf32>
    %c6_177 = arith.constant 6 : index
    %c0_178 = arith.constant 0 : index
    %c0_179 = arith.constant 0 : index
    %276 = vector.load %arg2[%c6_177, %c0_178, %c0_179] : memref<27x6x1xf32, #tpu.memory_space<vmem>>, vector<1x6x1xf32>
    %277 = vector.shape_cast %276 : vector<1x6x1xf32> to vector<6x1xf32>
    %278 = vector.broadcast %277 : vector<6x1xf32> to vector<6x224xf32>
    %279 = vector.broadcast %275 : vector<1x224xf32> to vector<6x224xf32>
    %280 = arith.mulf %278, %279 : vector<6x224xf32>
    %281 = arith.addf %273, %280 : vector<6x224xf32>
    %c1_180 = arith.constant 1 : index
    %c0_181 = arith.constant 0 : index
    %c33_182 = arith.constant 33 : index
    %282 = vector.load %arg1[%c1_180, %c0_181, %c33_182] : memref<2x3x258xf32, #tpu.memory_space<vmem>>, vector<1x1x224xf32>
    %283 = vector.shape_cast %282 : vector<1x1x224xf32> to vector<1x224xf32>
    %c7_183 = arith.constant 7 : index
    %c0_184 = arith.constant 0 : index
    %c0_185 = arith.constant 0 : index
    %284 = vector.load %arg2[%c7_183, %c0_184, %c0_185] : memref<27x6x1xf32, #tpu.memory_space<vmem>>, vector<1x6x1xf32>
    %285 = vector.shape_cast %284 : vector<1x6x1xf32> to vector<6x1xf32>
    %286 = vector.broadcast %285 : vector<6x1xf32> to vector<6x224xf32>
    %287 = vector.broadcast %283 : vector<1x224xf32> to vector<6x224xf32>
    %288 = arith.mulf %286, %287 : vector<6x224xf32>
    %289 = arith.addf %281, %288 : vector<6x224xf32>
    %c1_186 = arith.constant 1 : index
    %c0_187 = arith.constant 0 : index
    %c34_188 = arith.constant 34 : index
    %290 = vector.load %arg1[%c1_186, %c0_187, %c34_188] : memref<2x3x258xf32, #tpu.memory_space<vmem>>, vector<1x1x224xf32>
    %291 = vector.shape_cast %290 : vector<1x1x224xf32> to vector<1x224xf32>
    %c8_189 = arith.constant 8 : index
    %c0_190 = arith.constant 0 : index
    %c0_191 = arith.constant 0 : index
    %292 = vector.load %arg2[%c8_189, %c0_190, %c0_191] : memref<27x6x1xf32, #tpu.memory_space<vmem>>, vector<1x6x1xf32>
    %293 = vector.shape_cast %292 : vector<1x6x1xf32> to vector<6x1xf32>
    %294 = vector.broadcast %293 : vector<6x1xf32> to vector<6x224xf32>
    %295 = vector.broadcast %291 : vector<1x224xf32> to vector<6x224xf32>
    %296 = arith.mulf %294, %295 : vector<6x224xf32>
    %297 = arith.addf %289, %296 : vector<6x224xf32>
    %c1_192 = arith.constant 1 : index
    %c1_193 = arith.constant 1 : index
    %c0_194 = arith.constant 0 : index
    %298 = vector.load %arg1[%c1_192, %c1_193, %c0_194] : memref<2x3x258xf32, #tpu.memory_space<vmem>>, vector<1x1x224xf32>
    %299 = vector.shape_cast %298 : vector<1x1x224xf32> to vector<1x224xf32>
    %c9_195 = arith.constant 9 : index
    %c0_196 = arith.constant 0 : index
    %c0_197 = arith.constant 0 : index
    %300 = vector.load %arg2[%c9_195, %c0_196, %c0_197] : memref<27x6x1xf32, #tpu.memory_space<vmem>>, vector<1x6x1xf32>
    %301 = vector.shape_cast %300 : vector<1x6x1xf32> to vector<6x1xf32>
    %302 = vector.broadcast %301 : vector<6x1xf32> to vector<6x224xf32>
    %303 = vector.broadcast %299 : vector<1x224xf32> to vector<6x224xf32>
    %304 = arith.mulf %302, %303 : vector<6x224xf32>
    %305 = arith.addf %297, %304 : vector<6x224xf32>
    %c1_198 = arith.constant 1 : index
    %c1_199 = arith.constant 1 : index
    %c1_200 = arith.constant 1 : index
    %306 = vector.load %arg1[%c1_198, %c1_199, %c1_200] : memref<2x3x258xf32, #tpu.memory_space<vmem>>, vector<1x1x224xf32>
    %307 = vector.shape_cast %306 : vector<1x1x224xf32> to vector<1x224xf32>
    %c10_201 = arith.constant 10 : index
    %c0_202 = arith.constant 0 : index
    %c0_203 = arith.constant 0 : index
    %308 = vector.load %arg2[%c10_201, %c0_202, %c0_203] : memref<27x6x1xf32, #tpu.memory_space<vmem>>, vector<1x6x1xf32>
    %309 = vector.shape_cast %308 : vector<1x6x1xf32> to vector<6x1xf32>
    %310 = vector.broadcast %309 : vector<6x1xf32> to vector<6x224xf32>
    %311 = vector.broadcast %307 : vector<1x224xf32> to vector<6x224xf32>
    %312 = arith.mulf %310, %311 : vector<6x224xf32>
    %313 = arith.addf %305, %312 : vector<6x224xf32>
    %c1_204 = arith.constant 1 : index
    %c1_205 = arith.constant 1 : index
    %c2_206 = arith.constant 2 : index
    %314 = vector.load %arg1[%c1_204, %c1_205, %c2_206] : memref<2x3x258xf32, #tpu.memory_space<vmem>>, vector<1x1x224xf32>
    %315 = vector.shape_cast %314 : vector<1x1x224xf32> to vector<1x224xf32>
    %c11_207 = arith.constant 11 : index
    %c0_208 = arith.constant 0 : index
    %c0_209 = arith.constant 0 : index
    %316 = vector.load %arg2[%c11_207, %c0_208, %c0_209] : memref<27x6x1xf32, #tpu.memory_space<vmem>>, vector<1x6x1xf32>
    %317 = vector.shape_cast %316 : vector<1x6x1xf32> to vector<6x1xf32>
    %318 = vector.broadcast %317 : vector<6x1xf32> to vector<6x224xf32>
    %319 = vector.broadcast %315 : vector<1x224xf32> to vector<6x224xf32>
    %320 = arith.mulf %318, %319 : vector<6x224xf32>
    %321 = arith.addf %313, %320 : vector<6x224xf32>
    %c1_210 = arith.constant 1 : index
    %c1_211 = arith.constant 1 : index
    %c16_212 = arith.constant 16 : index
    %322 = vector.load %arg1[%c1_210, %c1_211, %c16_212] : memref<2x3x258xf32, #tpu.memory_space<vmem>>, vector<1x1x224xf32>
    %323 = vector.shape_cast %322 : vector<1x1x224xf32> to vector<1x224xf32>
    %c12_213 = arith.constant 12 : index
    %c0_214 = arith.constant 0 : index
    %c0_215 = arith.constant 0 : index
    %324 = vector.load %arg2[%c12_213, %c0_214, %c0_215] : memref<27x6x1xf32, #tpu.memory_space<vmem>>, vector<1x6x1xf32>
    %325 = vector.shape_cast %324 : vector<1x6x1xf32> to vector<6x1xf32>
    %326 = vector.broadcast %325 : vector<6x1xf32> to vector<6x224xf32>
    %327 = vector.broadcast %323 : vector<1x224xf32> to vector<6x224xf32>
    %328 = arith.mulf %326, %327 : vector<6x224xf32>
    %329 = arith.addf %321, %328 : vector<6x224xf32>
    %c1_216 = arith.constant 1 : index
    %c1_217 = arith.constant 1 : index
    %c17_218 = arith.constant 17 : index
    %330 = vector.load %arg1[%c1_216, %c1_217, %c17_218] : memref<2x3x258xf32, #tpu.memory_space<vmem>>, vector<1x1x224xf32>
    %331 = vector.shape_cast %330 : vector<1x1x224xf32> to vector<1x224xf32>
    %c13_219 = arith.constant 13 : index
    %c0_220 = arith.constant 0 : index
    %c0_221 = arith.constant 0 : index
    %332 = vector.load %arg2[%c13_219, %c0_220, %c0_221] : memref<27x6x1xf32, #tpu.memory_space<vmem>>, vector<1x6x1xf32>
    %333 = vector.shape_cast %332 : vector<1x6x1xf32> to vector<6x1xf32>
    %334 = vector.broadcast %333 : vector<6x1xf32> to vector<6x224xf32>
    %335 = vector.broadcast %331 : vector<1x224xf32> to vector<6x224xf32>
    %336 = arith.mulf %334, %335 : vector<6x224xf32>
    %337 = arith.addf %329, %336 : vector<6x224xf32>
    %c1_222 = arith.constant 1 : index
    %c1_223 = arith.constant 1 : index
    %c18_224 = arith.constant 18 : index
    %338 = vector.load %arg1[%c1_222, %c1_223, %c18_224] : memref<2x3x258xf32, #tpu.memory_space<vmem>>, vector<1x1x224xf32>
    %339 = vector.shape_cast %338 : vector<1x1x224xf32> to vector<1x224xf32>
    %c14_225 = arith.constant 14 : index
    %c0_226 = arith.constant 0 : index
    %c0_227 = arith.constant 0 : index
    %340 = vector.load %arg2[%c14_225, %c0_226, %c0_227] : memref<27x6x1xf32, #tpu.memory_space<vmem>>, vector<1x6x1xf32>
    %341 = vector.shape_cast %340 : vector<1x6x1xf32> to vector<6x1xf32>
    %342 = vector.broadcast %341 : vector<6x1xf32> to vector<6x224xf32>
    %343 = vector.broadcast %339 : vector<1x224xf32> to vector<6x224xf32>
    %344 = arith.mulf %342, %343 : vector<6x224xf32>
    %345 = arith.addf %337, %344 : vector<6x224xf32>
    %c1_228 = arith.constant 1 : index
    %c1_229 = arith.constant 1 : index
    %c32_230 = arith.constant 32 : index
    %346 = vector.load %arg1[%c1_228, %c1_229, %c32_230] : memref<2x3x258xf32, #tpu.memory_space<vmem>>, vector<1x1x224xf32>
    %347 = vector.shape_cast %346 : vector<1x1x224xf32> to vector<1x224xf32>
    %c15_231 = arith.constant 15 : index
    %c0_232 = arith.constant 0 : index
    %c0_233 = arith.constant 0 : index
    %348 = vector.load %arg2[%c15_231, %c0_232, %c0_233] : memref<27x6x1xf32, #tpu.memory_space<vmem>>, vector<1x6x1xf32>
    %349 = vector.shape_cast %348 : vector<1x6x1xf32> to vector<6x1xf32>
    %350 = vector.broadcast %349 : vector<6x1xf32> to vector<6x224xf32>
    %351 = vector.broadcast %347 : vector<1x224xf32> to vector<6x224xf32>
    %352 = arith.mulf %350, %351 : vector<6x224xf32>
    %353 = arith.addf %345, %352 : vector<6x224xf32>
    %c1_234 = arith.constant 1 : index
    %c1_235 = arith.constant 1 : index
    %c33_236 = arith.constant 33 : index
    %354 = vector.load %arg1[%c1_234, %c1_235, %c33_236] : memref<2x3x258xf32, #tpu.memory_space<vmem>>, vector<1x1x224xf32>
    %355 = vector.shape_cast %354 : vector<1x1x224xf32> to vector<1x224xf32>
    %c16_237 = arith.constant 16 : index
    %c0_238 = arith.constant 0 : index
    %c0_239 = arith.constant 0 : index
    %356 = vector.load %arg2[%c16_237, %c0_238, %c0_239] : memref<27x6x1xf32, #tpu.memory_space<vmem>>, vector<1x6x1xf32>
    %357 = vector.shape_cast %356 : vector<1x6x1xf32> to vector<6x1xf32>
    %358 = vector.broadcast %357 : vector<6x1xf32> to vector<6x224xf32>
    %359 = vector.broadcast %355 : vector<1x224xf32> to vector<6x224xf32>
    %360 = arith.mulf %358, %359 : vector<6x224xf32>
    %361 = arith.addf %353, %360 : vector<6x224xf32>
    %c1_240 = arith.constant 1 : index
    %c1_241 = arith.constant 1 : index
    %c34_242 = arith.constant 34 : index
    %362 = vector.load %arg1[%c1_240, %c1_241, %c34_242] : memref<2x3x258xf32, #tpu.memory_space<vmem>>, vector<1x1x224xf32>
    %363 = vector.shape_cast %362 : vector<1x1x224xf32> to vector<1x224xf32>
    %c17_243 = arith.constant 17 : index
    %c0_244 = arith.constant 0 : index
    %c0_245 = arith.constant 0 : index
    %364 = vector.load %arg2[%c17_243, %c0_244, %c0_245] : memref<27x6x1xf32, #tpu.memory_space<vmem>>, vector<1x6x1xf32>
    %365 = vector.shape_cast %364 : vector<1x6x1xf32> to vector<6x1xf32>
    %366 = vector.broadcast %365 : vector<6x1xf32> to vector<6x224xf32>
    %367 = vector.broadcast %363 : vector<1x224xf32> to vector<6x224xf32>
    %368 = arith.mulf %366, %367 : vector<6x224xf32>
    %369 = arith.addf %361, %368 : vector<6x224xf32>
    %c1_246 = arith.constant 1 : index
    %c2_247 = arith.constant 2 : index
    %c0_248 = arith.constant 0 : index
    %370 = vector.load %arg1[%c1_246, %c2_247, %c0_248] : memref<2x3x258xf32, #tpu.memory_space<vmem>>, vector<1x1x224xf32>
    %371 = vector.shape_cast %370 : vector<1x1x224xf32> to vector<1x224xf32>
    %c18_249 = arith.constant 18 : index
    %c0_250 = arith.constant 0 : index
    %c0_251 = arith.constant 0 : index
    %372 = vector.load %arg2[%c18_249, %c0_250, %c0_251] : memref<27x6x1xf32, #tpu.memory_space<vmem>>, vector<1x6x1xf32>
    %373 = vector.shape_cast %372 : vector<1x6x1xf32> to vector<6x1xf32>
    %374 = vector.broadcast %373 : vector<6x1xf32> to vector<6x224xf32>
    %375 = vector.broadcast %371 : vector<1x224xf32> to vector<6x224xf32>
    %376 = arith.mulf %374, %375 : vector<6x224xf32>
    %377 = arith.addf %369, %376 : vector<6x224xf32>
    %c1_252 = arith.constant 1 : index
    %c2_253 = arith.constant 2 : index
    %c1_254 = arith.constant 1 : index
    %378 = vector.load %arg1[%c1_252, %c2_253, %c1_254] : memref<2x3x258xf32, #tpu.memory_space<vmem>>, vector<1x1x224xf32>
    %379 = vector.shape_cast %378 : vector<1x1x224xf32> to vector<1x224xf32>
    %c19_255 = arith.constant 19 : index
    %c0_256 = arith.constant 0 : index
    %c0_257 = arith.constant 0 : index
    %380 = vector.load %arg2[%c19_255, %c0_256, %c0_257] : memref<27x6x1xf32, #tpu.memory_space<vmem>>, vector<1x6x1xf32>
    %381 = vector.shape_cast %380 : vector<1x6x1xf32> to vector<6x1xf32>
    %382 = vector.broadcast %381 : vector<6x1xf32> to vector<6x224xf32>
    %383 = vector.broadcast %379 : vector<1x224xf32> to vector<6x224xf32>
    %384 = arith.mulf %382, %383 : vector<6x224xf32>
    %385 = arith.addf %377, %384 : vector<6x224xf32>
    %c1_258 = arith.constant 1 : index
    %c2_259 = arith.constant 2 : index
    %c2_260 = arith.constant 2 : index
    %386 = vector.load %arg1[%c1_258, %c2_259, %c2_260] : memref<2x3x258xf32, #tpu.memory_space<vmem>>, vector<1x1x224xf32>
    %387 = vector.shape_cast %386 : vector<1x1x224xf32> to vector<1x224xf32>
    %c20_261 = arith.constant 20 : index
    %c0_262 = arith.constant 0 : index
    %c0_263 = arith.constant 0 : index
    %388 = vector.load %arg2[%c20_261, %c0_262, %c0_263] : memref<27x6x1xf32, #tpu.memory_space<vmem>>, vector<1x6x1xf32>
    %389 = vector.shape_cast %388 : vector<1x6x1xf32> to vector<6x1xf32>
    %390 = vector.broadcast %389 : vector<6x1xf32> to vector<6x224xf32>
    %391 = vector.broadcast %387 : vector<1x224xf32> to vector<6x224xf32>
    %392 = arith.mulf %390, %391 : vector<6x224xf32>
    %393 = arith.addf %385, %392 : vector<6x224xf32>
    %c1_264 = arith.constant 1 : index
    %c2_265 = arith.constant 2 : index
    %c16_266 = arith.constant 16 : index
    %394 = vector.load %arg1[%c1_264, %c2_265, %c16_266] : memref<2x3x258xf32, #tpu.memory_space<vmem>>, vector<1x1x224xf32>
    %395 = vector.shape_cast %394 : vector<1x1x224xf32> to vector<1x224xf32>
    %c21_267 = arith.constant 21 : index
    %c0_268 = arith.constant 0 : index
    %c0_269 = arith.constant 0 : index
    %396 = vector.load %arg2[%c21_267, %c0_268, %c0_269] : memref<27x6x1xf32, #tpu.memory_space<vmem>>, vector<1x6x1xf32>
    %397 = vector.shape_cast %396 : vector<1x6x1xf32> to vector<6x1xf32>
    %398 = vector.broadcast %397 : vector<6x1xf32> to vector<6x224xf32>
    %399 = vector.broadcast %395 : vector<1x224xf32> to vector<6x224xf32>
    %400 = arith.mulf %398, %399 : vector<6x224xf32>
    %401 = arith.addf %393, %400 : vector<6x224xf32>
    %c1_270 = arith.constant 1 : index
    %c2_271 = arith.constant 2 : index
    %c17_272 = arith.constant 17 : index
    %402 = vector.load %arg1[%c1_270, %c2_271, %c17_272] : memref<2x3x258xf32, #tpu.memory_space<vmem>>, vector<1x1x224xf32>
    %403 = vector.shape_cast %402 : vector<1x1x224xf32> to vector<1x224xf32>
    %c22_273 = arith.constant 22 : index
    %c0_274 = arith.constant 0 : index
    %c0_275 = arith.constant 0 : index
    %404 = vector.load %arg2[%c22_273, %c0_274, %c0_275] : memref<27x6x1xf32, #tpu.memory_space<vmem>>, vector<1x6x1xf32>
    %405 = vector.shape_cast %404 : vector<1x6x1xf32> to vector<6x1xf32>
    %406 = vector.broadcast %405 : vector<6x1xf32> to vector<6x224xf32>
    %407 = vector.broadcast %403 : vector<1x224xf32> to vector<6x224xf32>
    %408 = arith.mulf %406, %407 : vector<6x224xf32>
    %409 = arith.addf %401, %408 : vector<6x224xf32>
    %c1_276 = arith.constant 1 : index
    %c2_277 = arith.constant 2 : index
    %c18_278 = arith.constant 18 : index
    %410 = vector.load %arg1[%c1_276, %c2_277, %c18_278] : memref<2x3x258xf32, #tpu.memory_space<vmem>>, vector<1x1x224xf32>
    %411 = vector.shape_cast %410 : vector<1x1x224xf32> to vector<1x224xf32>
    %c23_279 = arith.constant 23 : index
    %c0_280 = arith.constant 0 : index
    %c0_281 = arith.constant 0 : index
    %412 = vector.load %arg2[%c23_279, %c0_280, %c0_281] : memref<27x6x1xf32, #tpu.memory_space<vmem>>, vector<1x6x1xf32>
    %413 = vector.shape_cast %412 : vector<1x6x1xf32> to vector<6x1xf32>
    %414 = vector.broadcast %413 : vector<6x1xf32> to vector<6x224xf32>
    %415 = vector.broadcast %411 : vector<1x224xf32> to vector<6x224xf32>
    %416 = arith.mulf %414, %415 : vector<6x224xf32>
    %417 = arith.addf %409, %416 : vector<6x224xf32>
    %c1_282 = arith.constant 1 : index
    %c2_283 = arith.constant 2 : index
    %c32_284 = arith.constant 32 : index
    %418 = vector.load %arg1[%c1_282, %c2_283, %c32_284] : memref<2x3x258xf32, #tpu.memory_space<vmem>>, vector<1x1x224xf32>
    %419 = vector.shape_cast %418 : vector<1x1x224xf32> to vector<1x224xf32>
    %c24_285 = arith.constant 24 : index
    %c0_286 = arith.constant 0 : index
    %c0_287 = arith.constant 0 : index
    %420 = vector.load %arg2[%c24_285, %c0_286, %c0_287] : memref<27x6x1xf32, #tpu.memory_space<vmem>>, vector<1x6x1xf32>
    %421 = vector.shape_cast %420 : vector<1x6x1xf32> to vector<6x1xf32>
    %422 = vector.broadcast %421 : vector<6x1xf32> to vector<6x224xf32>
    %423 = vector.broadcast %419 : vector<1x224xf32> to vector<6x224xf32>
    %424 = arith.mulf %422, %423 : vector<6x224xf32>
    %425 = arith.addf %417, %424 : vector<6x224xf32>
    %c1_288 = arith.constant 1 : index
    %c2_289 = arith.constant 2 : index
    %c33_290 = arith.constant 33 : index
    %426 = vector.load %arg1[%c1_288, %c2_289, %c33_290] : memref<2x3x258xf32, #tpu.memory_space<vmem>>, vector<1x1x224xf32>
    %427 = vector.shape_cast %426 : vector<1x1x224xf32> to vector<1x224xf32>
    %c25_291 = arith.constant 25 : index
    %c0_292 = arith.constant 0 : index
    %c0_293 = arith.constant 0 : index
    %428 = vector.load %arg2[%c25_291, %c0_292, %c0_293] : memref<27x6x1xf32, #tpu.memory_space<vmem>>, vector<1x6x1xf32>
    %429 = vector.shape_cast %428 : vector<1x6x1xf32> to vector<6x1xf32>
    %430 = vector.broadcast %429 : vector<6x1xf32> to vector<6x224xf32>
    %431 = vector.broadcast %427 : vector<1x224xf32> to vector<6x224xf32>
    %432 = arith.mulf %430, %431 : vector<6x224xf32>
    %433 = arith.addf %425, %432 : vector<6x224xf32>
    %c1_294 = arith.constant 1 : index
    %c2_295 = arith.constant 2 : index
    %c34_296 = arith.constant 34 : index
    %434 = vector.load %arg1[%c1_294, %c2_295, %c34_296] : memref<2x3x258xf32, #tpu.memory_space<vmem>>, vector<1x1x224xf32>
    %435 = vector.shape_cast %434 : vector<1x1x224xf32> to vector<1x224xf32>
    %c26_297 = arith.constant 26 : index
    %c0_298 = arith.constant 0 : index
    %c0_299 = arith.constant 0 : index
    %436 = vector.load %arg2[%c26_297, %c0_298, %c0_299] : memref<27x6x1xf32, #tpu.memory_space<vmem>>, vector<1x6x1xf32>
    %437 = vector.shape_cast %436 : vector<1x6x1xf32> to vector<6x1xf32>
    %438 = vector.broadcast %437 : vector<6x1xf32> to vector<6x224xf32>
    %439 = vector.broadcast %435 : vector<1x224xf32> to vector<6x224xf32>
    %440 = arith.mulf %438, %439 : vector<6x224xf32>
    %441 = arith.addf %433, %440 : vector<6x224xf32>
    %c1_300 = arith.constant 1 : index
    %c0_301 = arith.constant 0 : index
    %c0_302 = arith.constant 0 : index
    %442 = vector.load %arg4[%c1_300, %c0_301, %c0_302] : memref<2x6x224xf32, #tpu.memory_space<vmem>>, vector<1x6x224xf32>
    %443 = vector.shape_cast %442 : vector<1x6x224xf32> to vector<6x224xf32>
    %444 = vector.shape_cast %441 : vector<6x224xf32> to vector<1x6x224xf32>
    tpu.vector_store %arg4[%c1_300, %c0_301, %c0_302], %444 {strides = array<i32>} : memref<2x6x224xf32, #tpu.memory_space<vmem>>, vector<1x6x224xf32>,
    return
  }
  func.func @transform_0(%arg0: i32) -> (i32, i32, i32) {
    %c0_i32 = arith.constant 0 : i32
    %c0_i32_0 = arith.constant 0 : i32
    %c0_i32_1 = arith.constant 0 : i32
    return %arg0, %c0_i32, %c0_i32_0 : i32, i32, i32
  }
  func.func @transform_1(%arg0: i32) -> (i32, i32, i32) {
    %c0_i32 = arith.constant 0 : i32
    %c0_i32_0 = arith.constant 0 : i32
    %c0_i32_1 = arith.constant 0 : i32
    %c0_i32_2 = arith.constant 0 : i32
    return %c0_i32, %c0_i32_0, %c0_i32_1 : i32, i32, i32
  }
  func.func @transform_2(%arg0: i32) -> (i32, i32) {
    %c0_i32 = arith.constant 0 : i32
    %c0_i32_0 = arith.constant 0 : i32
    %c0_i32_1 = arith.constant 0 : i32
    return %c0_i32, %c0_i32_0 : i32, i32
  }
  func.func @transform_3(%arg0: i32) -> (i32, i32, i32) {
    %c0_i32 = arith.constant 0 : i32
    %c0_i32_0 = arith.constant 0 : i32
    %c0_i32_1 = arith.constant 0 : i32
    return %arg0, %c0_i32, %c0_i32_0 : i32, i32, i32
  }
}

</mosaic_0001>

<llo_original>
// kernel: tpu_custom_call.1
$region0: #{tpu_custom_call.1}
  #allocation0 [shape = 'u32[]', space=smem, size = 0x4, offset = 0x4, fixed_abs, tag = 'smem constant byte address 0x4 - core index']
  #allocation1 [shape = 'u32[72,128]{1,0:T(1,128)}', space=vmem, size = 0x9000, scoped, tag = 'internal scratch']
  %s0 = inlined_call_operand.vmem [shape: f32[2,3,258], index: 0, kind: input, shape index: {}]
  %s1 = inlined_call_operand.vmem [shape: f32[27,6,1], index: 1, kind: input, shape index: {}]
  %s2 = inlined_call_operand.vmem [shape: f32[6,1], index: 2, kind: input, shape index: {}]
  %s3 = inlined_call_operand.vmem [shape: f32[2,6,224], index: 3, kind: output, shape index: {}]
  %s4 = sld [smem:[#allocation0]]
  $region22: #{tpu_custom_call.1} parent=0
    _
  %s6 = ssub.s32 1, %s4
  %s7 = scalar_select 0, %s6, %s4
  // Predicated region
  $region2: #{tpu_custom_call.1} parent=0 // pred_check
    _
  $region3: #{tpu_custom_call.1} parent=0 // pred_check_branch
    %9 = sbr.rel (0) target = $region5
  $region4: #{tpu_custom_call.1} parent=0 // pred_region
    _
  $region5: #{tpu_custom_call.1} parent=0 // pred_fallthru
    _
  // Predicated region
  $region6: #{tpu_custom_call.1} parent=0 // pred_check
    _
  $region7: #{tpu_custom_call.1} parent=0 // pred_check_branch
    %11 = sbr.rel (0) target = $region9
  $region8: #{tpu_custom_call.1} parent=0 // pred_region
    _
  $region9: #{tpu_custom_call.1} parent=0 // pred_fallthru
    _
  // Predicated region
  $region10: #{tpu_custom_call.1} parent=0 // pred_check
    _
  $region11: #{tpu_custom_call.1} parent=0 // pred_check_branch
    %13 = sbr.rel (0) target = $region13
  $region12: #{tpu_custom_call.1} parent=0 // pred_region
    _
  $region13: #{tpu_custom_call.1} parent=0 // pred_fallthru
    _
  %v14 = vld [vmem:[%s2] sm:$0x3f]
  %16 = vset.pattern.permute.xlu0 0
  %17 = vperm.xlu0 %16, %v14
  %v18 = vpop.permute.xlu0 %17
  %v20 = vadd.f32 %v18, 0.0
  %v21 = vld [vmem:[%s0] ss:$4 sm:$0x3]
  %v22 = vld [vmem:[%s1] sm:$0x3f]
  %24 = vset.pattern.permute.xlu0 0
  %25 = vperm.xlu0 %24, %v22
  %v26 = vpop.permute.xlu0 %25
  %v29 = vperm.slane %v21, 0
  %v30 = vperm.slane %v21, 1
  %v33 = vmul.f32 %v26, %v29
  %v34 = vmul.f32 %v26, %v30
  %v35 = vadd.f32 %v20, %v33
  %v36 = vadd.f32 %v20, %v34
  %s37 = scalar_lea.vmem %s1, 8
  %v38 = vld [vmem:[%s37] sm:$0x3f]
  %40 = vset.pattern.permute.xlu0 0
  %41 = vperm.xlu0 %40, %v38
  %v42 = vpop.permute.xlu0 %41
  %v44 = vmul.f32 %v42, %v29
  %v45 = vmul.f32 %v42, %v30
  %48 = vrot.lane.b32.xlu0 %v44, 127
  %v49 = vpop.permute.xlu0 %48
  %50 = vrot.lane.b32.xlu0 %v45, 127
  %v51 = vpop.permute.xlu0 %50
  %vm52 = vcmask 1039360
  %v53 = vsel %vm52, %v49, %v51
  %v56 = vadd.f32 %v35, %v53
  %v57 = vadd.f32 %v36, %v51
  %s58 = scalar_lea.vmem %s1, 16
  %v59 = vld [vmem:[%s58] sm:$0x3f]
  %61 = vset.pattern.permute.xlu0 0
  %62 = vperm.xlu0 %61, %v59
  %v63 = vpop.permute.xlu0 %62
  %v65 = vmul.f32 %v63, %v29
  %v66 = vmul.f32 %v63, %v30
  %69 = vrot.lane.b32.xlu0 %v65, 126
  %v70 = vpop.permute.xlu0 %69
  %71 = vrot.lane.b32.xlu0 %v66, 126
  %v72 = vpop.permute.xlu0 %71
  %vm73 = vcmask 1031168
  %v74 = vsel %vm73, %v70, %v72
  %v77 = vadd.f32 %v56, %v74
  %v78 = vadd.f32 %v57, %v72
  %s79 = scalar_lea.vmem %s1, 24
  %v80 = vld [vmem:[%s79] sm:$0x3f]
  %82 = vset.pattern.permute.xlu0 0
  %83 = vperm.xlu0 %82, %v80
  %v84 = vpop.permute.xlu0 %83
  %v86 = vmul.f32 %v84, %v29
  %v87 = vmul.f32 %v84, %v30
  %90 = vrot.lane.b32.xlu0 %v86, 112
  %v91 = vpop.permute.xlu0 %90
  %92 = vrot.lane.b32.xlu0 %v87, 112
  %v93 = vpop.permute.xlu0 %92
  %vm94 = vcmask 916480
  %v95 = vsel %vm94, %v91, %v93
  %v98 = vadd.f32 %v77, %v95
  %v99 = vadd.f32 %v78, %v93
  %s100 = scalar_lea.vmem %s1, 32
  %v101 = vld [vmem:[%s100] sm:$0x3f]
  %103 = vset.pattern.permute.xlu0 0
  %104 = vperm.xlu0 %103, %v101
  %v105 = vpop.permute.xlu0 %104
  %v107 = vmul.f32 %v105, %v29
  %v108 = vmul.f32 %v105, %v30
  %111 = vrot.lane.b32.xlu0 %v107, 111
  %v112 = vpop.permute.xlu0 %111
  %113 = vrot.lane.b32.xlu0 %v108, 111
  %v114 = vpop.permute.xlu0 %113
  %vm115 = vcmask 908288
  %v116 = vsel %vm115, %v112, %v114
  %v119 = vadd.f32 %v98, %v116
  %v120 = vadd.f32 %v99, %v114
  %s121 = scalar_lea.vmem %s1, 40
  %v122 = vld [vmem:[%s121] sm:$0x3f]
  %124 = vset.pattern.permute.xlu0 0
  %125 = vperm.xlu0 %124, %v122
  %v126 = vpop.permute.xlu0 %125
  %v128 = vmul.f32 %v126, %v29
  %v129 = vmul.f32 %v126, %v30
  %132 = vrot.lane.b32.xlu0 %v128, 110
  %v133 = vpop.permute.xlu0 %132
  %134 = vrot.lane.b32.xlu0 %v129, 110
  %v135 = vpop.permute.xlu0 %134
  %vm136 = vcmask 900096
  %v137 = vsel %vm136, %v133, %v135
  %v140 = vadd.f32 %v119, %v137
  %v141 = vadd.f32 %v120, %v135
  %s142 = scalar_lea.vmem %s1, 48
  %v143 = vld [vmem:[%s142] sm:$0x3f]
  %145 = vset.pattern.permute.xlu0 0
  %146 = vperm.xlu0 %145, %v143
  %v147 = vpop.permute.xlu0 %146
  %v149 = vmul.f32 %v147, %v29
  %v150 = vmul.f32 %v147, %v30
  %153 = vrot.lane.b32.xlu0 %v149, 96
  %v154 = vpop.permute.xlu0 %153
  %155 = vrot.lane.b32.xlu0 %v150, 96
  %v156 = vpop.permute.xlu0 %155
  %vm157 = vcmask 785408
  %v158 = vsel %vm157, %v154, %v156
  %v161 = vadd.f32 %v140, %v158
  %v162 = vadd.f32 %v141, %v156
  %v163 = vld [vmem:[%s0] ss:$4 sm:$0x7]
  %s164 = scalar_lea.vmem %s1, 56
  %v165 = vld [vmem:[%s164] sm:$0x3f]
  %167 = vset.pattern.permute.xlu0 0
  %168 = vperm.xlu0 %167, %v165
  %v169 = vpop.permute.xlu0 %168
  %v172 = vperm.slane %v163, 0
  %v173 = vperm.slane %v163, 1
  %v174 = vperm.slane %v163, 2
  %v178 = vmul.f32 %v169, %v172
  %v179 = vmul.f32 %v169, %v173
  %v180 = vmul.f32 %v169, %v174
  %184 = vrot.lane.b32.xlu0 %v178, 95
  %v185 = vpop.permute.xlu0 %184
  %186 = vrot.lane.b32.xlu0 %v179, 95
  %v187 = vpop.permute.xlu0 %186
  %188 = vrot.lane.b32.xlu0 %v180, 95
  %v189 = vpop.permute.xlu0 %188
  %vm190 = vcmask 777216
  %v191 = vsel %vm190, %v185, %v187
  %v192 = vsel %vm190, %v187, %v189
  %v195 = vadd.f32 %v161, %v191
  %v196 = vadd.f32 %v162, %v192
  %s197 = scalar_lea.vmem %s1, 64
  %v198 = vld [vmem:[%s197] sm:$0x3f]
  %200 = vset.pattern.permute.xlu0 0
  %201 = vperm.xlu0 %200, %v198
  %v202 = vpop.permute.xlu0 %201
  %v204 = vmul.f32 %v202, %v172
  %v205 = vmul.f32 %v202, %v173
  %v206 = vmul.f32 %v202, %v174
  %210 = vrot.lane.b32.xlu0 %v204, 94
  %v211 = vpop.permute.xlu0 %210
  %212 = vrot.lane.b32.xlu0 %v205, 94
  %v213 = vpop.permute.xlu0 %212
  %214 = vrot.lane.b32.xlu0 %v206, 94
  %v215 = vpop.permute.xlu0 %214
  %vm216 = vcmask 769024
  %v217 = vsel %vm216, %v211, %v213
  %v218 = vsel %vm216, %v213, %v215
  %v221 = vadd.f32 %v195, %v217
  %v222 = vadd.f32 %v196, %v218
  %s223 = scalar_lea.vmem %s0, 1
  %v224 = vld [vmem:[%s223] ss:$4 sm:$0x3]
  %s225 = scalar_lea.vmem %s1, 72
  %v226 = vld [vmem:[%s225] sm:$0x3f]
  %228 = vset.pattern.permute.xlu0 0
  %229 = vperm.xlu0 %228, %v226
  %v230 = vpop.permute.xlu0 %229
  %v233 = vperm.slane %v224, 0
  %v234 = vperm.slane %v224, 1
  %v237 = vmul.f32 %v230, %v233
  %v238 = vmul.f32 %v230, %v234
  %v239 = vadd.f32 %v221, %v237
  %v240 = vadd.f32 %v222, %v238
  %s241 = scalar_lea.vmem %s1, 80
  %v242 = vld [vmem:[%s241] sm:$0x3f]
  %244 = vset.pattern.permute.xlu0 0
  %245 = vperm.xlu0 %244, %v242
  %v246 = vpop.permute.xlu0 %245
  %v248 = vmul.f32 %v246, %v233
  %v249 = vmul.f32 %v246, %v234
  %252 = vrot.lane.b32.xlu0 %v248, 127
  %v253 = vpop.permute.xlu0 %252
  %254 = vrot.lane.b32.xlu0 %v249, 127
  %v255 = vpop.permute.xlu0 %254
  %v256 = vsel %vm52, %v253, %v255
  %v259 = vadd.f32 %v239, %v256
  %v260 = vadd.f32 %v240, %v255
  %s261 = scalar_lea.vmem %s1, 88
  %v262 = vld [vmem:[%s261] sm:$0x3f]
  %264 = vset.pattern.permute.xlu0 0
  %265 = vperm.xlu0 %264, %v262
  %v266 = vpop.permute.xlu0 %265
  %v268 = vmul.f32 %v266, %v233
  %v269 = vmul.f32 %v266, %v234
  %272 = vrot.lane.b32.xlu0 %v268, 126
  %v273 = vpop.permute.xlu0 %272
  %274 = vrot.lane.b32.xlu0 %v269, 126
  %v275 = vpop.permute.xlu0 %274
  %v276 = vsel %vm73, %v273, %v275
  %v279 = vadd.f32 %v259, %v276
  %v280 = vadd.f32 %v260, %v275
  %s281 = scalar_lea.vmem %s1, 96
  %v282 = vld [vmem:[%s281] sm:$0x3f]
  %284 = vset.pattern.permute.xlu0 0
  %285 = vperm.xlu0 %284, %v282
  %v286 = vpop.permute.xlu0 %285
  %v288 = vmul.f32 %v286, %v233
  %v289 = vmul.f32 %v286, %v234
  %292 = vrot.lane.b32.xlu0 %v288, 112
  %v293 = vpop.permute.xlu0 %292
  %294 = vrot.lane.b32.xlu0 %v289, 112
  %v295 = vpop.permute.xlu0 %294
  %v296 = vsel %vm94, %v293, %v295
  %v299 = vadd.f32 %v279, %v296
  %v300 = vadd.f32 %v280, %v295
  %s301 = scalar_lea.vmem %s1, 104
  %v302 = vld [vmem:[%s301] sm:$0x3f]
  %304 = vset.pattern.permute.xlu0 0
  %305 = vperm.xlu0 %304, %v302
  %v306 = vpop.permute.xlu0 %305
  %v308 = vmul.f32 %v306, %v233
  %v309 = vmul.f32 %v306, %v234
  %312 = vrot.lane.b32.xlu0 %v308, 111
  %v313 = vpop.permute.xlu0 %312
  %314 = vrot.lane.b32.xlu0 %v309, 111
  %v315 = vpop.permute.xlu0 %314
  %v316 = vsel %vm115, %v313, %v315
  %v319 = vadd.f32 %v299, %v316
  %v320 = vadd.f32 %v300, %v315
  %s321 = scalar_lea.vmem %s1, 112
  %v322 = vld [vmem:[%s321] sm:$0x3f]
  %324 = vset.pattern.permute.xlu0 0
  %325 = vperm.xlu0 %324, %v322
  %v326 = vpop.permute.xlu0 %325
  %v328 = vmul.f32 %v326, %v233
  %v329 = vmul.f32 %v326, %v234
  %332 = vrot.lane.b32.xlu0 %v328, 110
  %v333 = vpop.permute.xlu0 %332
  %334 = vrot.lane.b32.xlu0 %v329, 110
  %v335 = vpop.permute.xlu0 %334
  %v336 = vsel %vm136, %v333, %v335
  %v339 = vadd.f32 %v319, %v336
  %v340 = vadd.f32 %v320, %v335
  %s341 = scalar_lea.vmem %s1, 120
  %v342 = vld [vmem:[%s341] sm:$0x3f]
  %344 = vset.pattern.permute.xlu0 0
  %345 = vperm.xlu0 %344, %v342
  %v346 = vpop.permute.xlu0 %345
  %v348 = vmul.f32 %v346, %v233
  %v349 = vmul.f32 %v346, %v234
  %352 = vrot.lane.b32.xlu0 %v348, 96
  %v353 = vpop.permute.xlu0 %352
  %354 = vrot.lane.b32.xlu0 %v349, 96
  %v355 = vpop.permute.xlu0 %354
  %v356 = vsel %vm157, %v353, %v355
  %v359 = vadd.f32 %v339, %v356
  %v360 = vadd.f32 %v340, %v355
  %v361 = vld [vmem:[%s223] ss:$4 sm:$0x7]
  %s362 = scalar_lea.vmem %s1, 128
  %v363 = vld [vmem:[%s362] sm:$0x3f]
  %365 = vset.pattern.permute.xlu0 0
  %366 = vperm.xlu0 %365, %v363
  %v367 = vpop.permute.xlu0 %366
  %v370 = vperm.slane %v361, 0
  %v371 = vperm.slane %v361, 1
  %v372 = vperm.slane %v361, 2
  %v376 = vmul.f32 %v367, %v370
  %v377 = vmul.f32 %v367, %v371
  %v378 = vmul.f32 %v367, %v372
  %382 = vrot.lane.b32.xlu0 %v376, 95
  %v383 = vpop.permute.xlu0 %382
  %384 = vrot.lane.b32.xlu0 %v377, 95
  %v385 = vpop.permute.xlu0 %384
  %386 = vrot.lane.b32.xlu0 %v378, 95
  %v387 = vpop.permute.xlu0 %386
  %v388 = vsel %vm190, %v383, %v385
  %v389 = vsel %vm190, %v385, %v387
  %v392 = vadd.f32 %v359, %v388
  %v393 = vadd.f32 %v360, %v389
  %s394 = scalar_lea.vmem %s1, 136
  %v395 = vld [vmem:[%s394] sm:$0x3f]
  %397 = vset.pattern.permute.xlu0 0
  %398 = vperm.xlu0 %397, %v395
  %v399 = vpop.permute.xlu0 %398
  %v401 = vmul.f32 %v399, %v370
  %v402 = vmul.f32 %v399, %v371
  %v403 = vmul.f32 %v399, %v372
  %407 = vrot.lane.b32.xlu0 %v401, 94
  %v408 = vpop.permute.xlu0 %407
  %409 = vrot.lane.b32.xlu0 %v402, 94
  %v410 = vpop.permute.xlu0 %409
  %411 = vrot.lane.b32.xlu0 %v403, 94
  %v412 = vpop.permute.xlu0 %411
  %v413 = vsel %vm216, %v408, %v410
  %v414 = vsel %vm216, %v410, %v412
  %v417 = vadd.f32 %v392, %v413
  %v418 = vadd.f32 %v393, %v414
  %s419 = scalar_lea.vmem %s0, 2
  %v420 = vld [vmem:[%s419] ss:$4 sm:$0x3]
  %s421 = scalar_lea.vmem %s1, 144
  %v422 = vld [vmem:[%s421] sm:$0x3f]
  %424 = vset.pattern.permute.xlu0 0
  %425 = vperm.xlu0 %424, %v422
  %v426 = vpop.permute.xlu0 %425
  %v429 = vperm.slane %v420, 0
  %v430 = vperm.slane %v420, 1
  %v433 = vmul.f32 %v426, %v429
  %v434 = vmul.f32 %v426, %v430
  %v435 = vadd.f32 %v417, %v433
  %v436 = vadd.f32 %v418, %v434
  %s437 = scalar_lea.vmem %s1, 152
  %v438 = vld [vmem:[%s437] sm:$0x3f]
  %440 = vset.pattern.permute.xlu0 0
  %441 = vperm.xlu0 %440, %v438
  %v442 = vpop.permute.xlu0 %441
  %v444 = vmul.f32 %v442, %v429
  %v445 = vmul.f32 %v442, %v430
  %448 = vrot.lane.b32.xlu0 %v444, 127
  %v449 = vpop.permute.xlu0 %448
  %450 = vrot.lane.b32.xlu0 %v445, 127
  %v451 = vpop.permute.xlu0 %450
  %v452 = vsel %vm52, %v449, %v451
  %v455 = vadd.f32 %v435, %v452
  %v456 = vadd.f32 %v436, %v451
  %s457 = scalar_lea.vmem %s1, 160
  %v458 = vld [vmem:[%s457] sm:$0x3f]
  %460 = vset.pattern.permute.xlu0 0
  %461 = vperm.xlu0 %460, %v458
  %v462 = vpop.permute.xlu0 %461
  %v464 = vmul.f32 %v462, %v429
  %v465 = vmul.f32 %v462, %v430
  %468 = vrot.lane.b32.xlu0 %v464, 126
  %v469 = vpop.permute.xlu0 %468
  %470 = vrot.lane.b32.xlu0 %v465, 126
  %v471 = vpop.permute.xlu0 %470
  %v472 = vsel %vm73, %v469, %v471
  %v475 = vadd.f32 %v455, %v472
  %v476 = vadd.f32 %v456, %v471
  %s477 = scalar_lea.vmem %s1, 168
  %v478 = vld [vmem:[%s477] sm:$0x3f]
  %480 = vset.pattern.permute.xlu0 0
  %481 = vperm.xlu0 %480, %v478
  %v482 = vpop.permute.xlu0 %481
  %v484 = vmul.f32 %v482, %v429
  %v485 = vmul.f32 %v482, %v430
  %488 = vrot.lane.b32.xlu0 %v484, 112
  %v489 = vpop.permute.xlu0 %488
  %490 = vrot.lane.b32.xlu0 %v485, 112
  %v491 = vpop.permute.xlu0 %490
  %v492 = vsel %vm94, %v489, %v491
  %v495 = vadd.f32 %v475, %v492
  %v496 = vadd.f32 %v476, %v491
  %s497 = scalar_lea.vmem %s1, 176
  %v498 = vld [vmem:[%s497] sm:$0x3f]
  %500 = vset.pattern.permute.xlu0 0
  %501 = vperm.xlu0 %500, %v498
  %v502 = vpop.permute.xlu0 %501
  %v504 = vmul.f32 %v502, %v429
  %v505 = vmul.f32 %v502, %v430
  %508 = vrot.lane.b32.xlu0 %v504, 111
  %v509 = vpop.permute.xlu0 %508
  %510 = vrot.lane.b32.xlu0 %v505, 111
  %v511 = vpop.permute.xlu0 %510
  %v512 = vsel %vm115, %v509, %v511
  %v515 = vadd.f32 %v495, %v512
  %v516 = vadd.f32 %v496, %v511
  %s517 = scalar_lea.vmem %s1, 184
  %v518 = vld [vmem:[%s517] sm:$0x3f]
  %520 = vset.pattern.permute.xlu0 0
  %521 = vperm.xlu0 %520, %v518
  %v522 = vpop.permute.xlu0 %521
  %v524 = vmul.f32 %v522, %v429
  %v525 = vmul.f32 %v522, %v430
  %528 = vrot.lane.b32.xlu0 %v524, 110
  %v529 = vpop.permute.xlu0 %528
  %530 = vrot.lane.b32.xlu0 %v525, 110
  %v531 = vpop.permute.xlu0 %530
  %v532 = vsel %vm136, %v529, %v531
  %v535 = vadd.f32 %v515, %v532
  %v536 = vadd.f32 %v516, %v531
  %s537 = scalar_lea.vmem %s1, 192
  %v538 = vld [vmem:[%s537] sm:$0x3f]
  %540 = vset.pattern.permute.xlu0 0
  %541 = vperm.xlu0 %540, %v538
  %v542 = vpop.permute.xlu0 %541
  %v544 = vmul.f32 %v542, %v429
  %v545 = vmul.f32 %v542, %v430
  %548 = vrot.lane.b32.xlu0 %v544, 96
  %v549 = vpop.permute.xlu0 %548
  %550 = vrot.lane.b32.xlu0 %v545, 96
  %v551 = vpop.permute.xlu0 %550
  %v552 = vsel %vm157, %v549, %v551
  %v555 = vadd.f32 %v535, %v552
  %v556 = vadd.f32 %v536, %v551
  %v557 = vld [vmem:[%s419] ss:$4 sm:$0x7]
  %s558 = scalar_lea.vmem %s1, 200
  %v559 = vld [vmem:[%s558] sm:$0x3f]
  %561 = vset.pattern.permute.xlu0 0
  %562 = vperm.xlu0 %561, %v559
  %v563 = vpop.permute.xlu0 %562
  %v566 = vperm.slane %v557, 0
  %v567 = vperm.slane %v557, 1
  %v568 = vperm.slane %v557, 2
  %v572 = vmul.f32 %v563, %v566
  %v573 = vmul.f32 %v563, %v567
  %v574 = vmul.f32 %v563, %v568
  %578 = vrot.lane.b32.xlu0 %v572, 95
  %v579 = vpop.permute.xlu0 %578
  %580 = vrot.lane.b32.xlu0 %v573, 95
  %v581 = vpop.permute.xlu0 %580
  %582 = vrot.lane.b32.xlu0 %v574, 95
  %v583 = vpop.permute.xlu0 %582
  %v584 = vsel %vm190, %v579, %v581
  %v585 = vsel %vm190, %v581, %v583
  %v588 = vadd.f32 %v555, %v584
  %v589 = vadd.f32 %v556, %v585
  %s590 = scalar_lea.vmem %s1, 208
  %v591 = vld [vmem:[%s590] sm:$0x3f]
  %593 = vset.pattern.permute.xlu0 0
  %594 = vperm.xlu0 %593, %v591
  %v595 = vpop.permute.xlu0 %594
  %v597 = vmul.f32 %v595, %v566
  %v598 = vmul.f32 %v595, %v567
  %v599 = vmul.f32 %v595, %v568
  %603 = vrot.lane.b32.xlu0 %v597, 94
  %v604 = vpop.permute.xlu0 %603
  %605 = vrot.lane.b32.xlu0 %v598, 94
  %v606 = vpop.permute.xlu0 %605
  %607 = vrot.lane.b32.xlu0 %v599, 94
  %v608 = vpop.permute.xlu0 %607
  %v609 = vsel %vm216, %v604, %v606
  %v610 = vsel %vm216, %v606, %v608
  %v613 = vadd.f32 %v588, %v609
  %v614 = vadd.f32 %v589, %v610
  %615 = vst [vmem:[%s3] sm:$0x3f] %v613
  %vm616 = vcmask 783360
  %617 = vst.msk [vmem:[%s3 + $0x8] sm:$0x3f] %vm616, %v614
  %s618 = scalar_lea.vmem %s0, 12
  %v619 = vld [vmem:[%s618] ss:$4 sm:$0x3]
  %v620 = vld [vmem:[%s1] sm:$0x3f]
  %622 = vset.pattern.permute.xlu0 0
  %623 = vperm.xlu0 %622, %v620
  %v624 = vpop.permute.xlu0 %623
  %v627 = vperm.slane %v619, 0
  %v628 = vperm.slane %v619, 1
  %v631 = vmul.f32 %v624, %v627
  %v632 = vmul.f32 %v624, %v628
  %v633 = vadd.f32 %v20, %v631
  %v634 = vadd.f32 %v20, %v632
  %v635 = vld [vmem:[%s37] sm:$0x3f]
  %637 = vset.pattern.permute.xlu0 0
  %638 = vperm.xlu0 %637, %v635
  %v639 = vpop.permute.xlu0 %638
  %v641 = vmul.f32 %v639, %v627
  %v642 = vmul.f32 %v639, %v628
  %645 = vrot.lane.b32.xlu0 %v641, 127
  %v646 = vpop.permute.xlu0 %645
  %647 = vrot.lane.b32.xlu0 %v642, 127
  %v648 = vpop.permute.xlu0 %647
  %v649 = vsel %vm52, %v646, %v648
  %v652 = vadd.f32 %v633, %v649
  %v653 = vadd.f32 %v634, %v648
  %v654 = vld [vmem:[%s58] sm:$0x3f]
  %656 = vset.pattern.permute.xlu0 0
  %657 = vperm.xlu0 %656, %v654
  %v658 = vpop.permute.xlu0 %657
  %v660 = vmul.f32 %v658, %v627
  %v661 = vmul.f32 %v658, %v628
  %664 = vrot.lane.b32.xlu0 %v660, 126
  %v665 = vpop.permute.xlu0 %664
  %666 = vrot.lane.b32.xlu0 %v661, 126
  %v667 = vpop.permute.xlu0 %666
  %v668 = vsel %vm73, %v665, %v667
  %v671 = vadd.f32 %v652, %v668
  %v672 = vadd.f32 %v653, %v667
  %v673 = vld [vmem:[%s79] sm:$0x3f]
  %675 = vset.pattern.permute.xlu0 0
  %676 = vperm.xlu0 %675, %v673
  %v677 = vpop.permute.xlu0 %676
  %v679 = vmul.f32 %v677, %v627
  %v680 = vmul.f32 %v677, %v628
  %683 = vrot.lane.b32.xlu0 %v679, 112
  %v684 = vpop.permute.xlu0 %683
  %685 = vrot.lane.b32.xlu0 %v680, 112
  %v686 = vpop.permute.xlu0 %685
  %v687 = vsel %vm94, %v684, %v686
  %v690 = vadd.f32 %v671, %v687
  %v691 = vadd.f32 %v672, %v686
  %v692 = vld [vmem:[%s100] sm:$0x3f]
  %694 = vset.pattern.permute.xlu0 0
  %695 = vperm.xlu0 %694, %v692
  %v696 = vpop.permute.xlu0 %695
  %v698 = vmul.f32 %v696, %v627
  %v699 = vmul.f32 %v696, %v628
  %702 = vrot.lane.b32.xlu0 %v698, 111
  %v703 = vpop.permute.xlu0 %702
  %704 = vrot.lane.b32.xlu0 %v699, 111
  %v705 = vpop.permute.xlu0 %704
  %v706 = vsel %vm115, %v703, %v705
  %v709 = vadd.f32 %v690, %v706
  %v710 = vadd.f32 %v691, %v705
  %v711 = vld [vmem:[%s121] sm:$0x3f]
  %713 = vset.pattern.permute.xlu0 0
  %714 = vperm.xlu0 %713, %v711
  %v715 = vpop.permute.xlu0 %714
  %v717 = vmul.f32 %v715, %v627
  %v718 = vmul.f32 %v715, %v628
  %721 = vrot.lane.b32.xlu0 %v717, 110
  %v722 = vpop.permute.xlu0 %721
  %723 = vrot.lane.b32.xlu0 %v718, 110
  %v724 = vpop.permute.xlu0 %723
  %v725 = vsel %vm136, %v722, %v724
  %v728 = vadd.f32 %v709, %v725
  %v729 = vadd.f32 %v710, %v724
  %v730 = vld [vmem:[%s142] sm:$0x3f]
  %732 = vset.pattern.permute.xlu0 0
  %733 = vperm.xlu0 %732, %v730
  %v734 = vpop.permute.xlu0 %733
  %v736 = vmul.f32 %v734, %v627
  %v737 = vmul.f32 %v734, %v628
  %740 = vrot.lane.b32.xlu0 %v736, 96
  %v741 = vpop.permute.xlu0 %740
  %742 = vrot.lane.b32.xlu0 %v737, 96
  %v743 = vpop.permute.xlu0 %742
  %v744 = vsel %vm157, %v741, %v743
  %v747 = vadd.f32 %v728, %v744
  %v748 = vadd.f32 %v729, %v743
  %v749 = vld [vmem:[%s618] ss:$4 sm:$0x7]
  %v750 = vld [vmem:[%s164] sm:$0x3f]
  %752 = vset.pattern.permute.xlu0 0
  %753 = vperm.xlu0 %752, %v750
  %v754 = vpop.permute.xlu0 %753
  %v757 = vperm.slane %v749, 0
  %v758 = vperm.slane %v749, 1
  %v759 = vperm.slane %v749, 2
  %v763 = vmul.f32 %v754, %v757
  %v764 = vmul.f32 %v754, %v758
  %v765 = vmul.f32 %v754, %v759
  %769 = vrot.lane.b32.xlu0 %v763, 95
  %v770 = vpop.permute.xlu0 %769
  %771 = vrot.lane.b32.xlu0 %v764, 95
  %v772 = vpop.permute.xlu0 %771
  %773 = vrot.lane.b32.xlu0 %v765, 95
  %v774 = vpop.permute.xlu0 %773
  %v775 = vsel %vm190, %v770, %v772
  %v776 = vsel %vm190, %v772, %v774
  %v779 = vadd.f32 %v747, %v775
  %v780 = vadd.f32 %v748, %v776
  %v781 = vld [vmem:[%s197] sm:$0x3f]
  %783 = vset.pattern.permute.xlu0 0
  %784 = vperm.xlu0 %783, %v781
  %v785 = vpop.permute.xlu0 %784
  %v787 = vmul.f32 %v785, %v757
  %v788 = vmul.f32 %v785, %v758
  %v789 = vmul.f32 %v785, %v759
  %793 = vrot.lane.b32.xlu0 %v787, 94
  %v794 = vpop.permute.xlu0 %793
  %795 = vrot.lane.b32.xlu0 %v788, 94
  %v796 = vpop.permute.xlu0 %795
  %797 = vrot.lane.b32.xlu0 %v789, 94
  %v798 = vpop.permute.xlu0 %797
  %v799 = vsel %vm216, %v794, %v796
  %v800 = vsel %vm216, %v796, %v798
  %v803 = vadd.f32 %v779, %v799
  %v804 = vadd.f32 %v780, %v800
  %s805 = scalar_lea.vmem %s618, 1
  %v806 = vld [vmem:[%s805] ss:$4 sm:$0x3]
  %v807 = vld [vmem:[%s225] sm:$0x3f]
  %809 = vset.pattern.permute.xlu0 0
  %810 = vperm.xlu0 %809, %v807
  %v811 = vpop.permute.xlu0 %810
  %v814 = vperm.slane %v806, 0
  %v815 = vperm.slane %v806, 1
  %v818 = vmul.f32 %v811, %v814
  %v819 = vmul.f32 %v811, %v815
  %v820 = vadd.f32 %v803, %v818
  %v821 = vadd.f32 %v804, %v819
  %v822 = vld [vmem:[%s241] sm:$0x3f]
  %824 = vset.pattern.permute.xlu0 0
  %825 = vperm.xlu0 %824, %v822
  %v826 = vpop.permute.xlu0 %825
  %v828 = vmul.f32 %v826, %v814
  %v829 = vmul.f32 %v826, %v815
  %832 = vrot.lane.b32.xlu0 %v828, 127
  %v833 = vpop.permute.xlu0 %832
  %834 = vrot.lane.b32.xlu0 %v829, 127
  %v835 = vpop.permute.xlu0 %834
  %v836 = vsel %vm52, %v833, %v835
  %v839 = vadd.f32 %v820, %v836
  %v840 = vadd.f32 %v821, %v835
  %v841 = vld [vmem:[%s261] sm:$0x3f]
  %843 = vset.pattern.permute.xlu0 0
  %844 = vperm.xlu0 %843, %v841
  %v845 = vpop.permute.xlu0 %844
  %v847 = vmul.f32 %v845, %v814
  %v848 = vmul.f32 %v845, %v815
  %851 = vrot.lane.b32.xlu0 %v847, 126
  %v852 = vpop.permute.xlu0 %851
  %853 = vrot.lane.b32.xlu0 %v848, 126
  %v854 = vpop.permute.xlu0 %853
  %v855 = vsel %vm73, %v852, %v854
  %v858 = vadd.f32 %v839, %v855
  %v859 = vadd.f32 %v840, %v854
  %v860 = vld [vmem:[%s281] sm:$0x3f]
  %862 = vset.pattern.permute.xlu0 0
  %863 = vperm.xlu0 %862, %v860
  %v864 = vpop.permute.xlu0 %863
  %v866 = vmul.f32 %v864, %v814
  %v867 = vmul.f32 %v864, %v815
  %870 = vrot.lane.b32.xlu0 %v866, 112
  %v871 = vpop.permute.xlu0 %870
  %872 = vrot.lane.b32.xlu0 %v867, 112
  %v873 = vpop.permute.xlu0 %872
  %v874 = vsel %vm94, %v871, %v873
  %v877 = vadd.f32 %v858, %v874
  %v878 = vadd.f32 %v859, %v873
  %v879 = vld [vmem:[%s301] sm:$0x3f]
  %881 = vset.pattern.permute.xlu0 0
  %882 = vperm.xlu0 %881, %v879
  %v883 = vpop.permute.xlu0 %882
  %v885 = vmul.f32 %v883, %v814
  %v886 = vmul.f32 %v883, %v815
  %889 = vrot.lane.b32.xlu0 %v885, 111
  %v890 = vpop.permute.xlu0 %889
  %891 = vrot.lane.b32.xlu0 %v886, 111
  %v892 = vpop.permute.xlu0 %891
  %v893 = vsel %vm115, %v890, %v892
  %v896 = vadd.f32 %v877, %v893
  %v897 = vadd.f32 %v878, %v892
  %v898 = vld [vmem:[%s321] sm:$0x3f]
  %900 = vset.pattern.permute.xlu0 0
  %901 = vperm.xlu0 %900, %v898
  %v902 = vpop.permute.xlu0 %901
  %v904 = vmul.f32 %v902, %v814
  %v905 = vmul.f32 %v902, %v815
  %908 = vrot.lane.b32.xlu0 %v904, 110
  %v909 = vpop.permute.xlu0 %908
  %910 = vrot.lane.b32.xlu0 %v905, 110
  %v911 = vpop.permute.xlu0 %910
  %v912 = vsel %vm136, %v909, %v911
  %v915 = vadd.f32 %v896, %v912
  %v916 = vadd.f32 %v897, %v911
  %v917 = vld [vmem:[%s341] sm:$0x3f]
  %919 = vset.pattern.permute.xlu0 0
  %920 = vperm.xlu0 %919, %v917
  %v921 = vpop.permute.xlu0 %920
  %v923 = vmul.f32 %v921, %v814
  %v924 = vmul.f32 %v921, %v815
  %927 = vrot.lane.b32.xlu0 %v923, 96
  %v928 = vpop.permute.xlu0 %927
  %929 = vrot.lane.b32.xlu0 %v924, 96
  %v930 = vpop.permute.xlu0 %929
  %v931 = vsel %vm157, %v928, %v930
  %v934 = vadd.f32 %v915, %v931
  %v935 = vadd.f32 %v916, %v930
  %v936 = vld [vmem:[%s805] ss:$4 sm:$0x7]
  %v937 = vld [vmem:[%s362] sm:$0x3f]
  %939 = vset.pattern.permute.xlu0 0
  %940 = vperm.xlu0 %939, %v937
  %v941 = vpop.permute.xlu0 %940
  %v944 = vperm.slane %v936, 0
  %v945 = vperm.slane %v936, 1
  %v946 = vperm.slane %v936, 2
  %v950 = vmul.f32 %v941, %v944
  %v951 = vmul.f32 %v941, %v945
  %v952 = vmul.f32 %v941, %v946
  %956 = vrot.lane.b32.xlu0 %v950, 95
  %v957 = vpop.permute.xlu0 %956
  %958 = vrot.lane.b32.xlu0 %v951, 95
  %v959 = vpop.permute.xlu0 %958
  %960 = vrot.lane.b32.xlu0 %v952, 95
  %v961 = vpop.permute.xlu0 %960
  %v962 = vsel %vm190, %v957, %v959
  %v963 = vsel %vm190, %v959, %v961
  %v966 = vadd.f32 %v934, %v962
  %v967 = vadd.f32 %v935, %v963
  %v968 = vld [vmem:[%s394] sm:$0x3f]
  %970 = vset.pattern.permute.xlu0 0
  %971 = vperm.xlu0 %970, %v968
  %v972 = vpop.permute.xlu0 %971
  %v974 = vmul.f32 %v972, %v944
  %v975 = vmul.f32 %v972, %v945
  %v976 = vmul.f32 %v972, %v946
  %980 = vrot.lane.b32.xlu0 %v974, 94
  %v981 = vpop.permute.xlu0 %980
  %982 = vrot.lane.b32.xlu0 %v975, 94
  %v983 = vpop.permute.xlu0 %982
  %984 = vrot.lane.b32.xlu0 %v976, 94
  %v985 = vpop.permute.xlu0 %984
  %v986 = vsel %vm216, %v981, %v983
  %v987 = vsel %vm216, %v983, %v985
  %v990 = vadd.f32 %v966, %v986
  %v991 = vadd.f32 %v967, %v987
  %s992 = scalar_lea.vmem %s618, 2
  %v993 = vld [vmem:[%s992] ss:$4 sm:$0x3]
  %v994 = vld [vmem:[%s421] sm:$0x3f]
  %996 = vset.pattern.permute.xlu0 0
  %997 = vperm.xlu0 %996, %v994
  %v998 = vpop.permute.xlu0 %997
  %v1001 = vperm.slane %v993, 0
  %v1002 = vperm.slane %v993, 1
  %v1005 = vmul.f32 %v998, %v1001
  %v1006 = vmul.f32 %v998, %v1002
  %v1007 = vadd.f32 %v990, %v1005
  %v1008 = vadd.f32 %v991, %v1006
  %v1009 = vld [vmem:[%s437] sm:$0x3f]
  %1011 = vset.pattern.permute.xlu0 0
  %1012 = vperm.xlu0 %1011, %v1009
  %v1013 = vpop.permute.xlu0 %1012
  %v1015 = vmul.f32 %v1013, %v1001
  %v1016 = vmul.f32 %v1013, %v1002
  %1019 = vrot.lane.b32.xlu0 %v1015, 127
  %v1020 = vpop.permute.xlu0 %1019
  %1021 = vrot.lane.b32.xlu0 %v1016, 127
  %v1022 = vpop.permute.xlu0 %1021
  %v1023 = vsel %vm52, %v1020, %v1022
  %v1026 = vadd.f32 %v1007, %v1023
  %v1027 = vadd.f32 %v1008, %v1022
  %v1028 = vld [vmem:[%s457] sm:$0x3f]
  %1030 = vset.pattern.permute.xlu0 0
  %1031 = vperm.xlu0 %1030, %v1028
  %v1032 = vpop.permute.xlu0 %1031
  %v1034 = vmul.f32 %v1032, %v1001
  %v1035 = vmul.f32 %v1032, %v1002
  %1038 = vrot.lane.b32.xlu0 %v1034, 126
  %v1039 = vpop.permute.xlu0 %1038
  %1040 = vrot.lane.b32.xlu0 %v1035, 126
  %v1041 = vpop.permute.xlu0 %1040
  %v1042 = vsel %vm73, %v1039, %v1041
  %v1045 = vadd.f32 %v1026, %v1042
  %v1046 = vadd.f32 %v1027, %v1041
  %v1047 = vld [vmem:[%s477] sm:$0x3f]
  %1049 = vset.pattern.permute.xlu0 0
  %1050 = vperm.xlu0 %1049, %v1047
  %v1051 = vpop.permute.xlu0 %1050
  %v1053 = vmul.f32 %v1051, %v1001
  %v1054 = vmul.f32 %v1051, %v1002
  %1057 = vrot.lane.b32.xlu0 %v1053, 112
  %v1058 = vpop.permute.xlu0 %1057
  %1059 = vrot.lane.b32.xlu0 %v1054, 112
  %v1060 = vpop.permute.xlu0 %1059
  %v1061 = vsel %vm94, %v1058, %v1060
  %v1064 = vadd.f32 %v1045, %v1061
  %v1065 = vadd.f32 %v1046, %v1060
  %v1066 = vld [vmem:[%s497] sm:$0x3f]
  %1068 = vset.pattern.permute.xlu0 0
  %1069 = vperm.xlu0 %1068, %v1066
  %v1070 = vpop.permute.xlu0 %1069
  %v1072 = vmul.f32 %v1070, %v1001
  %v1073 = vmul.f32 %v1070, %v1002
  %1076 = vrot.lane.b32.xlu0 %v1072, 111
  %v1077 = vpop.permute.xlu0 %1076
  %1078 = vrot.lane.b32.xlu0 %v1073, 111
  %v1079 = vpop.permute.xlu0 %1078
  %v1080 = vsel %vm115, %v1077, %v1079
  %v1083 = vadd.f32 %v1064, %v1080
  %v1084 = vadd.f32 %v1065, %v1079
  %v1085 = vld [vmem:[%s517] sm:$0x3f]
  %1087 = vset.pattern.permute.xlu0 0
  %1088 = vperm.xlu0 %1087, %v1085
  %v1089 = vpop.permute.xlu0 %1088
  %v1091 = vmul.f32 %v1089, %v1001
  %v1092 = vmul.f32 %v1089, %v1002
  %1095 = vrot.lane.b32.xlu0 %v1091, 110
  %v1096 = vpop.permute.xlu0 %1095
  %1097 = vrot.lane.b32.xlu0 %v1092, 110
  %v1098 = vpop.permute.xlu0 %1097
  %v1099 = vsel %vm136, %v1096, %v1098
  %v1102 = vadd.f32 %v1083, %v1099
  %v1103 = vadd.f32 %v1084, %v1098
  %v1104 = vld [vmem:[%s537] sm:$0x3f]
  %1106 = vset.pattern.permute.xlu0 0
  %1107 = vperm.xlu0 %1106, %v1104
  %v1108 = vpop.permute.xlu0 %1107
  %v1110 = vmul.f32 %v1108, %v1001
  %v1111 = vmul.f32 %v1108, %v1002
  %1114 = vrot.lane.b32.xlu0 %v1110, 96
  %v1115 = vpop.permute.xlu0 %1114
  %1116 = vrot.lane.b32.xlu0 %v1111, 96
  %v1117 = vpop.permute.xlu0 %1116
  %v1118 = vsel %vm157, %v1115, %v1117
  %v1121 = vadd.f32 %v1102, %v1118
  %v1122 = vadd.f32 %v1103, %v1117
  %v1123 = vld [vmem:[%s992] ss:$4 sm:$0x7]
  %v1124 = vld [vmem:[%s558] sm:$0x3f]
  %1126 = vset.pattern.permute.xlu0 0
  %1127 = vperm.xlu0 %1126, %v1124
  %v1128 = vpop.permute.xlu0 %1127
  %v1131 = vperm.slane %v1123, 0
  %v1132 = vperm.slane %v1123, 1
  %v1133 = vperm.slane %v1123, 2
  %v1137 = vmul.f32 %v1128, %v1131
  %v1138 = vmul.f32 %v1128, %v1132
  %v1139 = vmul.f32 %v1128, %v1133
  %1143 = vrot.lane.b32.xlu0 %v1137, 95
  %v1144 = vpop.permute.xlu0 %1143
  %1145 = vrot.lane.b32.xlu0 %v1138, 95
  %v1146 = vpop.permute.xlu0 %1145
  %1147 = vrot.lane.b32.xlu0 %v1139, 95
  %v1148 = vpop.permute.xlu0 %1147
  %v1149 = vsel %vm190, %v1144, %v1146
  %v1150 = vsel %vm190, %v1146, %v1148
  %v1153 = vadd.f32 %v1121, %v1149
  %v1154 = vadd.f32 %v1122, %v1150
  %v1155 = vld [vmem:[%s590] sm:$0x3f]
  %1157 = vset.pattern.permute.xlu0 0
  %1158 = vperm.xlu0 %1157, %v1155
  %v1159 = vpop.permute.xlu0 %1158
  %v1161 = vmul.f32 %v1159, %v1131
  %v1162 = vmul.f32 %v1159, %v1132
  %v1163 = vmul.f32 %v1159, %v1133
  %1167 = vrot.lane.b32.xlu0 %v1161, 94
  %v1168 = vpop.permute.xlu0 %1167
  %1169 = vrot.lane.b32.xlu0 %v1162, 94
  %v1170 = vpop.permute.xlu0 %1169
  %1171 = vrot.lane.b32.xlu0 %v1163, 94
  %v1172 = vpop.permute.xlu0 %1171
  %v1173 = vsel %vm216, %v1168, %v1170
  %v1174 = vsel %vm216, %v1170, %v1172
  %v1177 = vadd.f32 %v1153, %v1173
  %v1178 = vadd.f32 %v1154, %v1174
  %s1179 = scalar_lea.vmem %s3, 16
  %1180 = vst [vmem:[%s1179] sm:$0x3f] %v1177
  %1181 = vst.msk [vmem:[%s1179 + $0x8] sm:$0x3f] %vm616, %v1178
  // Predicated region
  $region14: #{tpu_custom_call.1} parent=0 // pred_check
    _
  $region15: #{tpu_custom_call.1} parent=0 // pred_check_branch
    %1183 = sbr.rel (0) target = $region17
  $region16: #{tpu_custom_call.1} parent=0 // pred_region
    _
  $region17: #{tpu_custom_call.1} parent=0 // pred_fallthru
    _
  // Predicated region
  $region18: #{tpu_custom_call.1} parent=0 // pred_check
    _
  $region19: #{tpu_custom_call.1} parent=0 // pred_check_branch
    %1185 = sbr.rel (0) target = $region21
  $region20: #{tpu_custom_call.1} parent=0 // pred_region
    _
  $region21: #{tpu_custom_call.1} parent=0 // pred_fallthru
    _

</llo_original>
